<compile_context>
chip_gen: v7x
topology: tpu7x:2x2x1
jax: 0.10.0
libtpu: 0.0.40
codegen_flags: <defaults>
</compile_context>

<pallas_src>
import functools

import jax
import jax.numpy as jnp
from jax.experimental import pallas as pl
from jax.experimental.pallas import tpu as pltpu

LANE = 128      # lane width: feature dims are zero-padded to this
SUBLANE = 8     # sublane width: node / graph counts padded to this


def _round_up(v, m):
    return (v + m - 1) // m * m


# ----------------------------------------------------------------------------
# Fused Pallas kernel: all GIN layers + pooling + head in one invocation
# ----------------------------------------------------------------------------
def gin_fused_kernel(x_ref, a_ref, p_ref,
                     w1_ref, b1_ref, gamma_ref, beta_ref,
                     w2_ref, b2_ref,
                     hw_ref, hb_ref,
                     out_ref, *, nc, n_real):
    f32 = jnp.float32
    bf16 = jnp.bfloat16

    a = a_ref[...]                      # bf16 [N, N]  -- loaded once, reused nc times
    p = p_ref[...]                      # bf16 [Gp, N]
    x = x_ref[...]                      # f32  [N, C]
    n_pad = x.shape[0]

    needs_mask = n_pad > n_real         # static (trace-time) decision
    if needs_mask:
        row_mask = jax.lax.broadcasted_iota(jnp.int32, (n_pad, 1), 0) < n_real
    inv_n = 1.0 / float(n_real)

    logits = jnp.zeros((p.shape[0], hb_ref.shape[-1]), f32)

    for l in range(nc):                 # static unroll; all weight indexing is static
        # GIN aggregation: self term in f32, neighbor sum on the MXU (bf16 in, f32 acc)
        agg = x + jnp.dot(a, x.astype(bf16), preferred_element_type=f32)

        # Linear 1
        h = (jnp.dot(agg.astype(bf16), w1_ref[l], preferred_element_type=f32)
             + b1_ref[l])
        if needs_mask:                  # keep padded node rows out of the BN statistics
            h = jnp.where(row_mask, h, 0.0)

        # BatchNorm1d over nodes (training-mode batch stats, biased variance), f32
        mean = jnp.sum(h, axis=0, keepdims=True) * inv_n
        d = h - mean
        dm = jnp.where(row_mask, d, 0.0) if needs_mask else d
        var = jnp.sum(dm * dm, axis=0, keepdims=True) * inv_n
        h = d * jax.lax.rsqrt(var + 1e-5) * gamma_ref[l] + beta_ref[l]
        h = jnp.maximum(h, 0.0)         # ReLU

        # Linear 2 + ReLU  (becomes next layer's X)
        x = jnp.maximum(
            jnp.dot(h.astype(bf16), w2_ref[l], preferred_element_type=f32) + b2_ref[l],
            0.0)
        if needs_mask:
            x = jnp.where(row_mask, x, 0.0)

        # global_add_pool + this layer's slice of the head Linear (== concat + matmul)
        pool = jnp.dot(p, x.astype(bf16), preferred_element_type=f32)
        logits = logits + jnp.dot(pool.astype(bf16), hw_ref[l],
                                  preferred_element_type=f32)

    z = logits + hb_ref[...]
    # sigmoid: exp and approx reciprocal both go to the EUP slot
    out_ref[...] = pl.reciprocal(1.0 + jnp.exp(-z), approx=True)


# ----------------------------------------------------------------------------
# Parameter packing: zero-pad feature dims to 128 lanes, stack per-layer params
# ----------------------------------------------------------------------------
def _pad2d(m, rows, cols):
    return jnp.pad(m, ((0, rows - m.shape[0]), (0, cols - m.shape[1])))


def _pack_params(params):
    convs = params["convs"]
    nc = len(convs)                                  # static: pytree structure
    in_ch = convs[0]["w1"].shape[0]
    hid = convs[0]["w2"].shape[0]
    out_c = params["lin_w"].shape[1]

    c_pad = max(_round_up(in_ch, LANE), _round_up(hid, LANE))  # common channel width
    o_pad = _round_up(out_c, LANE)

    w1 = jnp.stack([_pad2d(L["w1"], c_pad, c_pad) for L in convs]).astype(jnp.bfloat16)
    w2 = jnp.stack([_pad2d(L["w2"], c_pad, c_pad) for L in convs]).astype(jnp.bfloat16)
    b1 = jnp.stack([_pad2d(L["b1"], 1, c_pad) for L in convs])
    b2 = jnp.stack([_pad2d(L["b2"], 1, c_pad) for L in convs])
    gamma = jnp.stack([_pad2d(L["gamma"], 1, c_pad) for L in convs])
    beta = jnp.stack([_pad2d(L["beta"], 1, c_pad) for L in convs])

    hw = params["lin_w"].reshape(nc, hid, out_c)     # nc is a python int -> static shape
    hw = jnp.stack([_pad2d(hw[l], c_pad, o_pad) for l in range(nc)]).astype(jnp.bfloat16)
    hb = _pad2d(params["lin_b"], 1, o_pad)

    return (w1, b1, gamma, beta, w2, b2, hw, hb), (c_pad, o_pad)


# ----------------------------------------------------------------------------
# Forward wrapper
# ----------------------------------------------------------------------------
def gin_forward(params, x, edge_index, batch, num_graphs):
    n, f_in = x.shape
    nc = len(params["convs"])                        # static under jit
    out_c = params["lin_w"].shape[1]

    (w1, b1, gamma, beta, w2, b2, hw, hb), (c_pad, o_pad) = _pack_params(params)

    n_pad = _round_up(n, SUBLANE)
    g_pad = _round_up(num_graphs, SUBLANE)

    # Padded node features (f32)
    x_pad = jnp.zeros((n_pad, c_pad), jnp.float32).at[:n, :f_in].set(x)

    # Dense adjacency A[dst, src] = #edges src -> dst (PyG message direction), bf16
    src, dst = edge_index[0], edge_index[1]
    a = jnp.zeros((n_pad, n_pad), jnp.float32).at[dst, src].add(1.0).astype(jnp.bfloat16)

    # Pooling matrix P[g, i] = 1 if batch[i] == g (padded nodes belong to no graph), bf16
    batch_p = jnp.full((n_pad,), -1, jnp.int32).at[:n].set(batch.astype(jnp.int32))
    p = (jnp.arange(g_pad, dtype=jnp.int32)[:, None] == batch_p[None, :]).astype(jnp.bfloat16)

    kernel = functools.partial(gin_fused_kernel, nc=nc, n_real=n)
    vmem_spec = pl.BlockSpec(memory_space=pltpu.MemorySpace.VMEM)

    out = pl.pallas_call(
        kernel,
        out_shape=jax.ShapeDtypeStruct((g_pad, o_pad), jnp.float32),
        in_specs=[vmem_spec] * 11,
        out_specs=vmem_spec,
        compiler_params=pltpu.CompilerParams(vmem_limit_bytes=32 * 1024 * 1024),
    )(x_pad, a, p, w1, b1, gamma, beta, w2, b2, hw, hb)

    return out[:num_graphs, :out_c]


# ----------------------------------------------------------------------------
# Parameter init (PyTorch-shaped, unpadded; padding happens in _pack_params)
# ----------------------------------------------------------------------------
def init_gin_params(key, in_channels, hidden_channels, out_channels, nc):
    params = {"convs": []}
    c_in = in_channels
    for _ in range(nc):
        key, k1, k2 = jax.random.split(key, 3)
        params["convs"].append({
            # Linear weights stored already transposed: [in, out]
            "w1": jax.random.normal(k1, (c_in, hidden_channels), jnp.float32) * 0.1,
            "b1": jnp.zeros((1, hidden_channels), jnp.float32),
            "gamma": jnp.ones((1, hidden_channels), jnp.float32),
            "beta": jnp.zeros((1, hidden_channels), jnp.float32),
            "w2": jax.random.normal(k2, (hidden_channels, hidden_channels), jnp.float32) * 0.1,
            "b2": jnp.zeros((1, hidden_channels), jnp.float32),
        })
        c_in = hidden_channels
    key, kl = jax.random.split(key)
    params["lin_w"] = jax.random.normal(
        kl, (nc * hidden_channels, out_channels), jnp.float32) * 0.1
    params["lin_b"] = jnp.zeros((1, out_channels), jnp.float32)
    return params


# ----------------------------------------------------------------------------
if __name__ == "__main__":
    in_channels, hidden_channels, out_channels, nc = 16, 32, 8, 3
    num_nodes, num_graphs, num_edges = 32, 4, 64

    key = jax.random.PRNGKey(0)
    key, kx, ke = jax.random.split(key, 3)

    x = jax.random.normal(kx, (num_nodes, in_channels), jnp.float32)
    edge_index = jax.random.randint(ke, (2, num_edges), 0, num_nodes, jnp.int32)
    batch = jnp.repeat(jnp.arange(num_graphs, dtype=jnp.int32),
                       num_nodes // num_graphs)

    params = init_gin_params(key, in_channels, hidden_channels, out_channels, nc)

    fwd = jax.jit(functools.partial(gin_forward, num_graphs=num_graphs))
    out = fwd(params, x, edge_index, batch)
    jax.block_until_ready(out)

    assert out.shape == (num_graphs, out_channels)
    assert bool(jnp.all(jnp.isfinite(out)))
    assert bool(jnp.all((out >= 0.0) & (out <= 1.0)))   # sigmoid range
    print("KERNEL_OK")
</pallas_src>

<mosaic_0001>
module attributes {stable_mosaic.version = 11 : i64} {
  func.func private @main(%arg0: i32) attributes {dimension_semantics = [#tpu.dimension_semantics<core_parallel>], iteration_bounds = array<i64: 2>, tpu.core_type = #tpu.core_type<sc_scalar_subcore>, window_params = []} {
    return
  }
}

module attributes {stable_mosaic.version = 11 : i64} {
  func.func private @main(%arg0: i32) attributes {dimension_semantics = [#tpu.dimension_semantics<core_parallel>], iteration_bounds = array<i64: 2>, tpu.core_type = #tpu.core_type<sc_scalar_subcore>, window_params = []} {
    return
  }
}

module attributes {stable_mosaic.version = 11 : i64} {
  func.func @gin_fused_kernel(%arg0: memref<32x128xf32, #tpu.memory_space<vmem>>, %arg1: memref<32x32xbf16, #tpu.memory_space<vmem>>, %arg2: memref<8x32xbf16, #tpu.memory_space<vmem>>, %arg3: memref<3x128x128xbf16, #tpu.memory_space<vmem>>, %arg4: memref<3x1x128xf32, #tpu.memory_space<vmem>>, %arg5: memref<3x1x128xf32, #tpu.memory_space<vmem>>, %arg6: memref<3x1x128xf32, #tpu.memory_space<vmem>>, %arg7: memref<3x128x128xbf16, #tpu.memory_space<vmem>>, %arg8: memref<3x1x128xf32, #tpu.memory_space<vmem>>, %arg9: memref<3x128x128xbf16, #tpu.memory_space<vmem>>, %arg10: memref<1x128xf32, #tpu.memory_space<vmem>>, %arg11: memref<8x128xf32, #tpu.memory_space<vmem>>) attributes {dimension_semantics = [], scalar_prefetch = 0 : i64, scratch_operands = 0 : i64, tpu.core_type = #tpu.core_type<tc>} {
    %c0 = arith.constant 0 : index
    %c0_0 = arith.constant 0 : index
    %0 = vector.load %arg1[%c0, %c0_0] : memref<32x32xbf16, #tpu.memory_space<vmem>>, vector<32x32xbf16>
    %c0_1 = arith.constant 0 : index
    %c0_2 = arith.constant 0 : index
    %1 = vector.load %arg2[%c0_1, %c0_2] : memref<8x32xbf16, #tpu.memory_space<vmem>>, vector<8x32xbf16>
    %c0_3 = arith.constant 0 : index
    %c0_4 = arith.constant 0 : index
    %2 = vector.load %arg0[%c0_3, %c0_4] : memref<32x128xf32, #tpu.memory_space<vmem>>, vector<32x128xf32>
    %cst = arith.constant 0.000000e+00 : f32
    %3 = vector.broadcast %cst : f32 to vector<8x128xf32>
    %4 = arith.truncf %2 : vector<32x128xf32> to vector<32x128xbf16>
    %cst_5 = arith.constant dense<0.000000e+00> : vector<32x128xf32>
    %5 = tpu.matmul %0, %4, %cst_5 {dimension_numbers = #tpu.dot_dimension_numbers<[1], [0], [0], [1], [0, 0, 1, 1], [], []>} : vector<32x32xbf16>, vector<32x128xbf16>, vector<32x128xf32> -> vector<32x128xf32>
    %6 = arith.addf %2, %5 : vector<32x128xf32>
    %7 = arith.truncf %6 : vector<32x128xf32> to vector<32x128xbf16>
    %c0_6 = arith.constant 0 : index
    %c0_7 = arith.constant 0 : index
    %c0_8 = arith.constant 0 : index
    %8 = vector.load %arg3[%c0_6, %c0_7, %c0_8] : memref<3x128x128xbf16, #tpu.memory_space<vmem>>, vector<1x128x128xbf16>
    %9 = vector.shape_cast %8 : vector<1x128x128xbf16> to vector<128x128xbf16>
    %cst_9 = arith.constant dense<0.000000e+00> : vector<32x128xf32>
    %10 = tpu.matmul %7, %9, %cst_9 {dimension_numbers = #tpu.dot_dimension_numbers<[1], [0], [0], [1], [0, 0, 1, 1], [], []>} : vector<32x128xbf16>, vector<128x128xbf16>, vector<32x128xf32> -> vector<32x128xf32>
    %c0_10 = arith.constant 0 : index
    %c0_11 = arith.constant 0 : index
    %c0_12 = arith.constant 0 : index
    %11 = vector.load %arg4[%c0_10, %c0_11, %c0_12] : memref<3x1x128xf32, #tpu.memory_space<vmem>>, vector<1x1x128xf32>
    %12 = vector.shape_cast %11 : vector<1x1x128xf32> to vector<1x128xf32>
    %13 = vector.broadcast %12 : vector<1x128xf32> to vector<32x128xf32>
    %14 = arith.addf %10, %13 : vector<32x128xf32>
    %cst_13 = arith.constant dense<0.000000e+00> : vector<128xf32>
    %15 = vector.multi_reduction <add>, %14, %cst_13 [0] : vector<32x128xf32> to vector<128xf32>
    %16 = vector.shape_cast %15 : vector<128xf32> to vector<1x128xf32>
    %cst_14 = arith.constant 3.125000e-02 : f32
    %17 = vector.broadcast %cst_14 : f32 to vector<1x128xf32>
    %18 = arith.mulf %16, %17 : vector<1x128xf32>
    %19 = vector.broadcast %18 : vector<1x128xf32> to vector<32x128xf32>
    %20 = arith.subf %14, %19 : vector<32x128xf32>
    %21 = arith.mulf %20, %20 : vector<32x128xf32>
    %cst_15 = arith.constant dense<0.000000e+00> : vector<128xf32>
    %22 = vector.multi_reduction <add>, %21, %cst_15 [0] : vector<32x128xf32> to vector<128xf32>
    %23 = vector.shape_cast %22 : vector<128xf32> to vector<1x128xf32>
    %cst_16 = arith.constant 3.125000e-02 : f32
    %24 = vector.broadcast %cst_16 : f32 to vector<1x128xf32>
    %25 = arith.mulf %23, %24 : vector<1x128xf32>
    %cst_17 = arith.constant 9.99999974E-6 : f32
    %26 = vector.broadcast %cst_17 : f32 to vector<1x128xf32>
    %27 = arith.addf %25, %26 : vector<1x128xf32>
    %28 = math.rsqrt %27 : vector<1x128xf32>
    %29 = vector.broadcast %28 : vector<1x128xf32> to vector<32x128xf32>
    %30 = arith.mulf %20, %29 : vector<32x128xf32>
    %c0_18 = arith.constant 0 : index
    %c0_19 = arith.constant 0 : index
    %c0_20 = arith.constant 0 : index
    %31 = vector.load %arg5[%c0_18, %c0_19, %c0_20] : memref<3x1x128xf32, #tpu.memory_space<vmem>>, vector<1x1x128xf32>
    %32 = vector.shape_cast %31 : vector<1x1x128xf32> to vector<1x128xf32>
    %33 = vector.broadcast %32 : vector<1x128xf32> to vector<32x128xf32>
    %34 = arith.mulf %30, %33 : vector<32x128xf32>
    %c0_21 = arith.constant 0 : index
    %c0_22 = arith.constant 0 : index
    %c0_23 = arith.constant 0 : index
    %35 = vector.load %arg6[%c0_21, %c0_22, %c0_23] : memref<3x1x128xf32, #tpu.memory_space<vmem>>, vector<1x1x128xf32>
    %36 = vector.shape_cast %35 : vector<1x1x128xf32> to vector<1x128xf32>
    %37 = vector.broadcast %36 : vector<1x128xf32> to vector<32x128xf32>
    %38 = arith.addf %34, %37 : vector<32x128xf32>
    %cst_24 = arith.constant 0.000000e+00 : f32
    %39 = vector.broadcast %cst_24 : f32 to vector<32x128xf32>
    %40 = arith.maximumf %38, %39 : vector<32x128xf32>
    %41 = arith.truncf %40 : vector<32x128xf32> to vector<32x128xbf16>
    %c0_25 = arith.constant 0 : index
    %c0_26 = arith.constant 0 : index
    %c0_27 = arith.constant 0 : index
    %42 = vector.load %arg7[%c0_25, %c0_26, %c0_27] : memref<3x128x128xbf16, #tpu.memory_space<vmem>>, vector<1x128x128xbf16>
    %43 = vector.shape_cast %42 : vector<1x128x128xbf16> to vector<128x128xbf16>
    %cst_28 = arith.constant dense<0.000000e+00> : vector<32x128xf32>
    %44 = tpu.matmul %41, %43, %cst_28 {dimension_numbers = #tpu.dot_dimension_numbers<[1], [0], [0], [1], [0, 0, 1, 1], [], []>} : vector<32x128xbf16>, vector<128x128xbf16>, vector<32x128xf32> -> vector<32x128xf32>
    %c0_29 = arith.constant 0 : index
    %c0_30 = arith.constant 0 : index
    %c0_31 = arith.constant 0 : index
    %45 = vector.load %arg8[%c0_29, %c0_30, %c0_31] : memref<3x1x128xf32, #tpu.memory_space<vmem>>, vector<1x1x128xf32>
    %46 = vector.shape_cast %45 : vector<1x1x128xf32> to vector<1x128xf32>
    %47 = vector.broadcast %46 : vector<1x128xf32> to vector<32x128xf32>
    %48 = arith.addf %44, %47 : vector<32x128xf32>
    %cst_32 = arith.constant 0.000000e+00 : f32
    %49 = vector.broadcast %cst_32 : f32 to vector<32x128xf32>
    %50 = arith.maximumf %48, %49 : vector<32x128xf32>
    %51 = arith.truncf %50 : vector<32x128xf32> to vector<32x128xbf16>
    %cst_33 = arith.constant dense<0.000000e+00> : vector<8x128xf32>
    %52 = tpu.matmul %1, %51, %cst_33 {dimension_numbers = #tpu.dot_dimension_numbers<[1], [0], [0], [1], [0, 0, 1, 1], [], []>} : vector<8x32xbf16>, vector<32x128xbf16>, vector<8x128xf32> -> vector<8x128xf32>
    %53 = arith.truncf %52 : vector<8x128xf32> to vector<8x128xbf16>
    %c0_34 = arith.constant 0 : index
    %c0_35 = arith.constant 0 : index
    %c0_36 = arith.constant 0 : index
    %54 = vector.load %arg9[%c0_34, %c0_35, %c0_36] : memref<3x128x128xbf16, #tpu.memory_space<vmem>>, vector<1x128x128xbf16>
    %55 = vector.shape_cast %54 : vector<1x128x128xbf16> to vector<128x128xbf16>
    %cst_37 = arith.constant dense<0.000000e+00> : vector<8x128xf32>
    %56 = tpu.matmul %53, %55, %cst_37 {dimension_numbers = #tpu.dot_dimension_numbers<[1], [0], [0], [1], [0, 0, 1, 1], [], []>} : vector<8x128xbf16>, vector<128x128xbf16>, vector<8x128xf32> -> vector<8x128xf32>
    %57 = arith.addf %3, %56 : vector<8x128xf32>
    %58 = arith.truncf %50 : vector<32x128xf32> to vector<32x128xbf16>
    %cst_38 = arith.constant dense<0.000000e+00> : vector<32x128xf32>
    %59 = tpu.matmul %0, %58, %cst_38 {dimension_numbers = #tpu.dot_dimension_numbers<[1], [0], [0], [1], [0, 0, 1, 1], [], []>} : vector<32x32xbf16>, vector<32x128xbf16>, vector<32x128xf32> -> vector<32x128xf32>
    %60 = arith.addf %50, %59 : vector<32x128xf32>
    %61 = arith.truncf %60 : vector<32x128xf32> to vector<32x128xbf16>
    %c1 = arith.constant 1 : index
    %c0_39 = arith.constant 0 : index
    %c0_40 = arith.constant 0 : index
    %62 = vector.load %arg3[%c1, %c0_39, %c0_40] : memref<3x128x128xbf16, #tpu.memory_space<vmem>>, vector<1x128x128xbf16>
    %63 = vector.shape_cast %62 : vector<1x128x128xbf16> to vector<128x128xbf16>
    %cst_41 = arith.constant dense<0.000000e+00> : vector<32x128xf32>
    %64 = tpu.matmul %61, %63, %cst_41 {dimension_numbers = #tpu.dot_dimension_numbers<[1], [0], [0], [1], [0, 0, 1, 1], [], []>} : vector<32x128xbf16>, vector<128x128xbf16>, vector<32x128xf32> -> vector<32x128xf32>
    %c1_42 = arith.constant 1 : index
    %c0_43 = arith.constant 0 : index
    %c0_44 = arith.constant 0 : index
    %65 = vector.load %arg4[%c1_42, %c0_43, %c0_44] : memref<3x1x128xf32, #tpu.memory_space<vmem>>, vector<1x1x128xf32>
    %66 = vector.shape_cast %65 : vector<1x1x128xf32> to vector<1x128xf32>
    %67 = vector.broadcast %66 : vector<1x128xf32> to vector<32x128xf32>
    %68 = arith.addf %64, %67 : vector<32x128xf32>
    %cst_45 = arith.constant dense<0.000000e+00> : vector<128xf32>
    %69 = vector.multi_reduction <add>, %68, %cst_45 [0] : vector<32x128xf32> to vector<128xf32>
    %70 = vector.shape_cast %69 : vector<128xf32> to vector<1x128xf32>
    %cst_46 = arith.constant 3.125000e-02 : f32
    %71 = vector.broadcast %cst_46 : f32 to vector<1x128xf32>
    %72 = arith.mulf %70, %71 : vector<1x128xf32>
    %73 = vector.broadcast %72 : vector<1x128xf32> to vector<32x128xf32>
    %74 = arith.subf %68, %73 : vector<32x128xf32>
    %75 = arith.mulf %74, %74 : vector<32x128xf32>
    %cst_47 = arith.constant dense<0.000000e+00> : vector<128xf32>
    %76 = vector.multi_reduction <add>, %75, %cst_47 [0] : vector<32x128xf32> to vector<128xf32>
    %77 = vector.shape_cast %76 : vector<128xf32> to vector<1x128xf32>
    %cst_48 = arith.constant 3.125000e-02 : f32
    %78 = vector.broadcast %cst_48 : f32 to vector<1x128xf32>
    %79 = arith.mulf %77, %78 : vector<1x128xf32>
    %cst_49 = arith.constant 9.99999974E-6 : f32
    %80 = vector.broadcast %cst_49 : f32 to vector<1x128xf32>
    %81 = arith.addf %79, %80 : vector<1x128xf32>
    %82 = math.rsqrt %81 : vector<1x128xf32>
    %83 = vector.broadcast %82 : vector<1x128xf32> to vector<32x128xf32>
    %84 = arith.mulf %74, %83 : vector<32x128xf32>
    %c1_50 = arith.constant 1 : index
    %c0_51 = arith.constant 0 : index
    %c0_52 = arith.constant 0 : index
    %85 = vector.load %arg5[%c1_50, %c0_51, %c0_52] : memref<3x1x128xf32, #tpu.memory_space<vmem>>, vector<1x1x128xf32>
    %86 = vector.shape_cast %85 : vector<1x1x128xf32> to vector<1x128xf32>
    %87 = vector.broadcast %86 : vector<1x128xf32> to vector<32x128xf32>
    %88 = arith.mulf %84, %87 : vector<32x128xf32>
    %c1_53 = arith.constant 1 : index
    %c0_54 = arith.constant 0 : index
    %c0_55 = arith.constant 0 : index
    %89 = vector.load %arg6[%c1_53, %c0_54, %c0_55] : memref<3x1x128xf32, #tpu.memory_space<vmem>>, vector<1x1x128xf32>
    %90 = vector.shape_cast %89 : vector<1x1x128xf32> to vector<1x128xf32>
    %91 = vector.broadcast %90 : vector<1x128xf32> to vector<32x128xf32>
    %92 = arith.addf %88, %91 : vector<32x128xf32>
    %cst_56 = arith.constant 0.000000e+00 : f32
    %93 = vector.broadcast %cst_56 : f32 to vector<32x128xf32>
    %94 = arith.maximumf %92, %93 : vector<32x128xf32>
    %95 = arith.truncf %94 : vector<32x128xf32> to vector<32x128xbf16>
    %c1_57 = arith.constant 1 : index
    %c0_58 = arith.constant 0 : index
    %c0_59 = arith.constant 0 : index
    %96 = vector.load %arg7[%c1_57, %c0_58, %c0_59] : memref<3x128x128xbf16, #tpu.memory_space<vmem>>, vector<1x128x128xbf16>
    %97 = vector.shape_cast %96 : vector<1x128x128xbf16> to vector<128x128xbf16>
    %cst_60 = arith.constant dense<0.000000e+00> : vector<32x128xf32>
    %98 = tpu.matmul %95, %97, %cst_60 {dimension_numbers = #tpu.dot_dimension_numbers<[1], [0], [0], [1], [0, 0, 1, 1], [], []>} : vector<32x128xbf16>, vector<128x128xbf16>, vector<32x128xf32> -> vector<32x128xf32>
    %c1_61 = arith.constant 1 : index
    %c0_62 = arith.constant 0 : index
    %c0_63 = arith.constant 0 : index
    %99 = vector.load %arg8[%c1_61, %c0_62, %c0_63] : memref<3x1x128xf32, #tpu.memory_space<vmem>>, vector<1x1x128xf32>
    %100 = vector.shape_cast %99 : vector<1x1x128xf32> to vector<1x128xf32>
    %101 = vector.broadcast %100 : vector<1x128xf32> to vector<32x128xf32>
    %102 = arith.addf %98, %101 : vector<32x128xf32>
    %cst_64 = arith.constant 0.000000e+00 : f32
    %103 = vector.broadcast %cst_64 : f32 to vector<32x128xf32>
    %104 = arith.maximumf %102, %103 : vector<32x128xf32>
    %105 = arith.truncf %104 : vector<32x128xf32> to vector<32x128xbf16>
    %cst_65 = arith.constant dense<0.000000e+00> : vector<8x128xf32>
    %106 = tpu.matmul %1, %105, %cst_65 {dimension_numbers = #tpu.dot_dimension_numbers<[1], [0], [0], [1], [0, 0, 1, 1], [], []>} : vector<8x32xbf16>, vector<32x128xbf16>, vector<8x128xf32> -> vector<8x128xf32>
    %107 = arith.truncf %106 : vector<8x128xf32> to vector<8x128xbf16>
    %c1_66 = arith.constant 1 : index
    %c0_67 = arith.constant 0 : index
    %c0_68 = arith.constant 0 : index
    %108 = vector.load %arg9[%c1_66, %c0_67, %c0_68] : memref<3x128x128xbf16, #tpu.memory_space<vmem>>, vector<1x128x128xbf16>
    %109 = vector.shape_cast %108 : vector<1x128x128xbf16> to vector<128x128xbf16>
    %cst_69 = arith.constant dense<0.000000e+00> : vector<8x128xf32>
    %110 = tpu.matmul %107, %109, %cst_69 {dimension_numbers = #tpu.dot_dimension_numbers<[1], [0], [0], [1], [0, 0, 1, 1], [], []>} : vector<8x128xbf16>, vector<128x128xbf16>, vector<8x128xf32> -> vector<8x128xf32>
    %111 = arith.addf %57, %110 : vector<8x128xf32>
    %112 = arith.truncf %104 : vector<32x128xf32> to vector<32x128xbf16>
    %cst_70 = arith.constant dense<0.000000e+00> : vector<32x128xf32>
    %113 = tpu.matmul %0, %112, %cst_70 {dimension_numbers = #tpu.dot_dimension_numbers<[1], [0], [0], [1], [0, 0, 1, 1], [], []>} : vector<32x32xbf16>, vector<32x128xbf16>, vector<32x128xf32> -> vector<32x128xf32>
    %114 = arith.addf %104, %113 : vector<32x128xf32>
    %115 = arith.truncf %114 : vector<32x128xf32> to vector<32x128xbf16>
    %c2 = arith.constant 2 : index
    %c0_71 = arith.constant 0 : index
    %c0_72 = arith.constant 0 : index
    %116 = vector.load %arg3[%c2, %c0_71, %c0_72] : memref<3x128x128xbf16, #tpu.memory_space<vmem>>, vector<1x128x128xbf16>
    %117 = vector.shape_cast %116 : vector<1x128x128xbf16> to vector<128x128xbf16>
    %cst_73 = arith.constant dense<0.000000e+00> : vector<32x128xf32>
    %118 = tpu.matmul %115, %117, %cst_73 {dimension_numbers = #tpu.dot_dimension_numbers<[1], [0], [0], [1], [0, 0, 1, 1], [], []>} : vector<32x128xbf16>, vector<128x128xbf16>, vector<32x128xf32> -> vector<32x128xf32>
    %c2_74 = arith.constant 2 : index
    %c0_75 = arith.constant 0 : index
    %c0_76 = arith.constant 0 : index
    %119 = vector.load %arg4[%c2_74, %c0_75, %c0_76] : memref<3x1x128xf32, #tpu.memory_space<vmem>>, vector<1x1x128xf32>
    %120 = vector.shape_cast %119 : vector<1x1x128xf32> to vector<1x128xf32>
    %121 = vector.broadcast %120 : vector<1x128xf32> to vector<32x128xf32>
    %122 = arith.addf %118, %121 : vector<32x128xf32>
    %cst_77 = arith.constant dense<0.000000e+00> : vector<128xf32>
    %123 = vector.multi_reduction <add>, %122, %cst_77 [0] : vector<32x128xf32> to vector<128xf32>
    %124 = vector.shape_cast %123 : vector<128xf32> to vector<1x128xf32>
    %cst_78 = arith.constant 3.125000e-02 : f32
    %125 = vector.broadcast %cst_78 : f32 to vector<1x128xf32>
    %126 = arith.mulf %124, %125 : vector<1x128xf32>
    %127 = vector.broadcast %126 : vector<1x128xf32> to vector<32x128xf32>
    %128 = arith.subf %122, %127 : vector<32x128xf32>
    %129 = arith.mulf %128, %128 : vector<32x128xf32>
    %cst_79 = arith.constant dense<0.000000e+00> : vector<128xf32>
    %130 = vector.multi_reduction <add>, %129, %cst_79 [0] : vector<32x128xf32> to vector<128xf32>
    %131 = vector.shape_cast %130 : vector<128xf32> to vector<1x128xf32>
    %cst_80 = arith.constant 3.125000e-02 : f32
    %132 = vector.broadcast %cst_80 : f32 to vector<1x128xf32>
    %133 = arith.mulf %131, %132 : vector<1x128xf32>
    %cst_81 = arith.constant 9.99999974E-6 : f32
    %134 = vector.broadcast %cst_81 : f32 to vector<1x128xf32>
    %135 = arith.addf %133, %134 : vector<1x128xf32>
    %136 = math.rsqrt %135 : vector<1x128xf32>
    %137 = vector.broadcast %136 : vector<1x128xf32> to vector<32x128xf32>
    %138 = arith.mulf %128, %137 : vector<32x128xf32>
    %c2_82 = arith.constant 2 : index
    %c0_83 = arith.constant 0 : index
    %c0_84 = arith.constant 0 : index
    %139 = vector.load %arg5[%c2_82, %c0_83, %c0_84] : memref<3x1x128xf32, #tpu.memory_space<vmem>>, vector<1x1x128xf32>
    %140 = vector.shape_cast %139 : vector<1x1x128xf32> to vector<1x128xf32>
    %141 = vector.broadcast %140 : vector<1x128xf32> to vector<32x128xf32>
    %142 = arith.mulf %138, %141 : vector<32x128xf32>
    %c2_85 = arith.constant 2 : index
    %c0_86 = arith.constant 0 : index
    %c0_87 = arith.constant 0 : index
    %143 = vector.load %arg6[%c2_85, %c0_86, %c0_87] : memref<3x1x128xf32, #tpu.memory_space<vmem>>, vector<1x1x128xf32>
    %144 = vector.shape_cast %143 : vector<1x1x128xf32> to vector<1x128xf32>
    %145 = vector.broadcast %144 : vector<1x128xf32> to vector<32x128xf32>
    %146 = arith.addf %142, %145 : vector<32x128xf32>
    %cst_88 = arith.constant 0.000000e+00 : f32
    %147 = vector.broadcast %cst_88 : f32 to vector<32x128xf32>
    %148 = arith.maximumf %146, %147 : vector<32x128xf32>
    %149 = arith.truncf %148 : vector<32x128xf32> to vector<32x128xbf16>
    %c2_89 = arith.constant 2 : index
    %c0_90 = arith.constant 0 : index
    %c0_91 = arith.constant 0 : index
    %150 = vector.load %arg7[%c2_89, %c0_90, %c0_91] : memref<3x128x128xbf16, #tpu.memory_space<vmem>>, vector<1x128x128xbf16>
    %151 = vector.shape_cast %150 : vector<1x128x128xbf16> to vector<128x128xbf16>
    %cst_92 = arith.constant dense<0.000000e+00> : vector<32x128xf32>
    %152 = tpu.matmul %149, %151, %cst_92 {dimension_numbers = #tpu.dot_dimension_numbers<[1], [0], [0], [1], [0, 0, 1, 1], [], []>} : vector<32x128xbf16>, vector<128x128xbf16>, vector<32x128xf32> -> vector<32x128xf32>
    %c2_93 = arith.constant 2 : index
    %c0_94 = arith.constant 0 : index
    %c0_95 = arith.constant 0 : index
    %153 = vector.load %arg8[%c2_93, %c0_94, %c0_95] : memref<3x1x128xf32, #tpu.memory_space<vmem>>, vector<1x1x128xf32>
    %154 = vector.shape_cast %153 : vector<1x1x128xf32> to vector<1x128xf32>
    %155 = vector.broadcast %154 : vector<1x128xf32> to vector<32x128xf32>
    %156 = arith.addf %152, %155 : vector<32x128xf32>
    %cst_96 = arith.constant 0.000000e+00 : f32
    %157 = vector.broadcast %cst_96 : f32 to vector<32x128xf32>
    %158 = arith.maximumf %156, %157 : vector<32x128xf32>
    %159 = arith.truncf %158 : vector<32x128xf32> to vector<32x128xbf16>
    %cst_97 = arith.constant dense<0.000000e+00> : vector<8x128xf32>
    %160 = tpu.matmul %1, %159, %cst_97 {dimension_numbers = #tpu.dot_dimension_numbers<[1], [0], [0], [1], [0, 0, 1, 1], [], []>} : vector<8x32xbf16>, vector<32x128xbf16>, vector<8x128xf32> -> vector<8x128xf32>
    %161 = arith.truncf %160 : vector<8x128xf32> to vector<8x128xbf16>
    %c2_98 = arith.constant 2 : index
    %c0_99 = arith.constant 0 : index
    %c0_100 = arith.constant 0 : index
    %162 = vector.load %arg9[%c2_98, %c0_99, %c0_100] : memref<3x128x128xbf16, #tpu.memory_space<vmem>>, vector<1x128x128xbf16>
    %163 = vector.shape_cast %162 : vector<1x128x128xbf16> to vector<128x128xbf16>
    %cst_101 = arith.constant dense<0.000000e+00> : vector<8x128xf32>
    %164 = tpu.matmul %161, %163, %cst_101 {dimension_numbers = #tpu.dot_dimension_numbers<[1], [0], [0], [1], [0, 0, 1, 1], [], []>} : vector<8x128xbf16>, vector<128x128xbf16>, vector<8x128xf32> -> vector<8x128xf32>
    %165 = arith.addf %111, %164 : vector<8x128xf32>
    %c0_102 = arith.constant 0 : index
    %c0_103 = arith.constant 0 : index
    %166 = vector.load %arg10[%c0_102, %c0_103] : memref<1x128xf32, #tpu.memory_space<vmem>>, vector<1x128xf32>
    %167 = vector.broadcast %166 : vector<1x128xf32> to vector<8x128xf32>
    %168 = arith.addf %165, %167 : vector<8x128xf32>
    %cst_104 = arith.constant 0.000000e+00 : f32
    %169 = vector.broadcast %cst_104 : f32 to vector<8x128xf32>
    %170 = arith.subf %169, %168 : vector<8x128xf32>
    %171 = math.exp %170 : vector<8x128xf32>
    %cst_105 = arith.constant 1.000000e+00 : f32
    %172 = vector.broadcast %cst_105 : f32 to vector<8x128xf32>
    %173 = arith.addf %172, %171 : vector<8x128xf32>
    %174 = tpu.reciprocal %173 {approx = true} : vector<8x128xf32> -> vector<8x128xf32>
    %c0_106 = arith.constant 0 : index
    %c0_107 = arith.constant 0 : index
    %175 = vector.load %arg11[%c0_106, %c0_107] : memref<8x128xf32, #tpu.memory_space<vmem>>, vector<8x128xf32>
    tpu.vector_store %arg11[%c0_106, %c0_107], %174 {strides = array<i32>} : memref<8x128xf32, #tpu.memory_space<vmem>>, vector<8x128xf32>,
    return
  }
}

</mosaic_0001>

<llo_original>
// kernel: gin_forward.1
$region0: #{gin_forward.1}
  #allocation0 [shape = 'u32[]', space=smem, size = 0x4, offset = 0x4, fixed_abs, tag = 'smem constant byte address 0x4 - core index']
  #allocation1 [shape = 'u32[144,128]{1,0:T(1,128)}', space=vmem, size = 0x12000, scoped, tag = 'internal scratch']
  %s0 = inlined_call_operand.vmem [shape: f32[32,128], index: 0, kind: input, shape index: {}]
  %s1 = inlined_call_operand.vmem [shape: bf16[32,32], index: 1, kind: input, shape index: {}]
  %s2 = inlined_call_operand.vmem [shape: bf16[8,32], index: 2, kind: input, shape index: {}]
  %s3 = inlined_call_operand.vmem [shape: bf16[3,128,128], index: 3, kind: input, shape index: {}]
  %s4 = inlined_call_operand.vmem [shape: f32[3,1,128], index: 4, kind: input, shape index: {}]
  %s5 = inlined_call_operand.vmem [shape: f32[3,1,128], index: 5, kind: input, shape index: {}]
  %s6 = inlined_call_operand.vmem [shape: f32[3,1,128], index: 6, kind: input, shape index: {}]
  %s7 = inlined_call_operand.vmem [shape: bf16[3,128,128], index: 7, kind: input, shape index: {}]
  %s8 = inlined_call_operand.vmem [shape: f32[3,1,128], index: 8, kind: input, shape index: {}]
  %s9 = inlined_call_operand.vmem [shape: bf16[3,128,128], index: 9, kind: input, shape index: {}]
  %s10 = inlined_call_operand.vmem [shape: f32[1,128], index: 10, kind: input, shape index: {}]
  %s11 = inlined_call_operand.vmem [shape: f32[8,128], index: 11, kind: output, shape index: {}]
  %s12 = sld [smem:[#allocation0]]
  $region54: #{gin_forward.1} parent=0
    _
  %s14 = ssub.s32 1, %s12
  %s15 = scalar_select 0, %s14, %s12
  // Predicated region
  $region2: #{gin_forward.1} parent=0 // pred_check
    _
  $region3: #{gin_forward.1} parent=0 // pred_check_branch
    %17 = sbr.rel (0) target = $region5
  $region4: #{gin_forward.1} parent=0 // pred_region
    _
  $region5: #{gin_forward.1} parent=0 // pred_fallthru
    _
  // Predicated region
  $region6: #{gin_forward.1} parent=0 // pred_check
    _
  $region7: #{gin_forward.1} parent=0 // pred_check_branch
    %19 = sbr.rel (0) target = $region9
  $region8: #{gin_forward.1} parent=0 // pred_region
    _
  $region9: #{gin_forward.1} parent=0 // pred_fallthru
    _
  // Predicated region
  $region10: #{gin_forward.1} parent=0 // pred_check
    _
  $region11: #{gin_forward.1} parent=0 // pred_check_branch
    %21 = sbr.rel (0) target = $region13
  $region12: #{gin_forward.1} parent=0 // pred_region
    _
  $region13: #{gin_forward.1} parent=0 // pred_fallthru
    _
  // Predicated region
  $region14: #{gin_forward.1} parent=0 // pred_check
    _
  $region15: #{gin_forward.1} parent=0 // pred_check_branch
    %23 = sbr.rel (0) target = $region17
  $region16: #{gin_forward.1} parent=0 // pred_region
    _
  $region17: #{gin_forward.1} parent=0 // pred_fallthru
    _
  // Predicated region
  $region18: #{gin_forward.1} parent=0 // pred_check
    _
  $region19: #{gin_forward.1} parent=0 // pred_check_branch
    %25 = sbr.rel (0) target = $region21
  $region20: #{gin_forward.1} parent=0 // pred_region
    _
  $region21: #{gin_forward.1} parent=0 // pred_fallthru
    _
  // Predicated region
  $region22: #{gin_forward.1} parent=0 // pred_check
    _
  $region23: #{gin_forward.1} parent=0 // pred_check_branch
    %27 = sbr.rel (0) target = $region25
  $region24: #{gin_forward.1} parent=0 // pred_region
    _
  $region25: #{gin_forward.1} parent=0 // pred_fallthru
    _
  // Predicated region
  $region26: #{gin_forward.1} parent=0 // pred_check
    _
  $region27: #{gin_forward.1} parent=0 // pred_check_branch
    %29 = sbr.rel (0) target = $region29
  $region28: #{gin_forward.1} parent=0 // pred_region
    _
  $region29: #{gin_forward.1} parent=0 // pred_fallthru
    _
  // Predicated region
  $region30: #{gin_forward.1} parent=0 // pred_check
    _
  $region31: #{gin_forward.1} parent=0 // pred_check_branch
    %31 = sbr.rel (0) target = $region33
  $region32: #{gin_forward.1} parent=0 // pred_region
    _
  $region33: #{gin_forward.1} parent=0 // pred_fallthru
    _
  // Predicated region
  $region34: #{gin_forward.1} parent=0 // pred_check
    _
  $region35: #{gin_forward.1} parent=0 // pred_check_branch
    %33 = sbr.rel (0) target = $region37
  $region36: #{gin_forward.1} parent=0 // pred_region
    _
  $region37: #{gin_forward.1} parent=0 // pred_fallthru
    _
  // Predicated region
  $region38: #{gin_forward.1} parent=0 // pred_check
    _
  $region39: #{gin_forward.1} parent=0 // pred_check_branch
    %35 = sbr.rel (0) target = $region41
  $region40: #{gin_forward.1} parent=0 // pred_region
    _
  $region41: #{gin_forward.1} parent=0 // pred_fallthru
    _
  // Predicated region
  $region42: #{gin_forward.1} parent=0 // pred_check
    _
  $region43: #{gin_forward.1} parent=0 // pred_check_branch
    %37 = sbr.rel (0) target = $region45
  $region44: #{gin_forward.1} parent=0 // pred_region
    _
  $region45: #{gin_forward.1} parent=0 // pred_fallthru
    _
  %v39 = vld [vmem:[%s1] sm:$0xf]
  %v40 = vld [vmem:[%s1 + $0x4] sm:$0xf]
  %v41 = vld [vmem:[%s1 + $0x8] sm:$0xf]
  %v42 = vld [vmem:[%s1 + $0xc] sm:$0xf]
  %v43 = vld [vmem:[%s2] sm:$0xf]
  %v44 = vld [vmem:[%s0] sm:$0xff]
  %v45 = vld [vmem:[%s0 + $0x8] sm:$0xff]
  %v46 = vld [vmem:[%s0 + $0x10] sm:$0xff]
  %v47 = vld [vmem:[%s0 + $0x18] sm:$0xff]
  %v48 = vpack.c.bf16 %v45, %v44
  %v49 = vpack.c.bf16 %v47, %v46
  %v54 = vunpack.c.l.b16 %v39
  %v55 = vunpack.c.l.b16 %v40
  %v56 = vunpack.c.l.b16 %v41
  %v57 = vunpack.c.l.b16 %v42
  %v58 = vpack.c.b16 %v55, %v54
  %v59 = vpack.c.b16 %v57, %v56
  %vm60 = vcmask 261120
  %v62 = vsel %vm60, %v58, 0
  %v65 = vsel %vm60, %v59, 0
  %67 = vmatprep.subr.bf16.mxu0 0
  %68 = vmatpush1.bf16.msra.mxu0 %v48
  %69 = vmatprep.subr.bf16.mxu0 0
  %70 = vmatpush1.bf16.msra.mxu0 %v49
  %71 = vmatprep.subr.bf16.mxu0 0
  %72 = vmatpush1.bf16.msra.mxu0 0
  %73 = vmatprep.subr.bf16.mxu0 0
  %74 = vmatpush1.bf16.msra.mxu0 0
  %75 = vmatprep.subr.bf16.mxu0 0
  %76 = vmatpush1.bf16.msra.mxu0 0
  %77 = vmatprep.subr.bf16.mxu0 0
  %78 = vmatpush1.bf16.msra.mxu0 0
  %79 = vmatprep.subr.bf16.mxu0 0
  %80 = vmatpush1.bf16.msra.mxu0 0
  %81 = vmatprep.subr.bf16.mxu0 0
  %82 = vmatpush1.bf16.msra.mxu0 0
  %83 = vmatprep.subr.bf16.mxu0 0
  %84 = vmatpush1.bf16.msra.mxu0 0
  %85 = vmatprep.subr.bf16.mxu0 0
  %86 = vmatpush1.bf16.msra.mxu0 0
  %87 = vmatprep.subr.bf16.mxu0 0
  %88 = vmatpush1.bf16.msra.mxu0 0
  %89 = vmatprep.subr.bf16.mxu0 0
  %90 = vmatpush1.bf16.msra.mxu0 0
  %91 = vmatprep.subr.bf16.mxu0 0
  %92 = vmatpush1.bf16.msra.mxu0 0
  %93 = vmatprep.subr.bf16.mxu0 0
  %94 = vmatpush1.bf16.msra.mxu0 0
  %95 = vmatprep.subr.bf16.mxu0 0
  %96 = vmatpush1.bf16.msra.mxu0 0
  %97 = vmatprep.subr.bf16.mxu0 0
  %98 = vmatpush1.bf16.msra.mxu0 0
  %99 = vmatprep.mubr.bf16.mxu0 0
  %100 = vmatmul.mubr.bf16.gmra.mrb[0].mxu0 %v62
  %v101 = vpop.f32.mrb[0].mxu0
  %v102 = vadd.f32 0.0, %v101
  %v103 = vpop.f32.mrb[0].mxu0
  %v104 = vpop.f32.mrb[0].mxu0
  %v105 = vadd.f32 0.0, %v104
  %v106 = vpop.f32.mrb[0].mxu0
  %107 = vmatprep.mubr.bf16.mxu0 0
  %108 = vmatmul.mubr.bf16.gmra.mrb[0].mxu0 %v65
  %v109 = vpop.f32.mrb[0].mxu0
  %v110 = vadd.f32 0.0, %v109
  %v111 = vpop.f32.mrb[0].mxu0
  %v112 = vpop.f32.mrb[0].mxu0
  %v113 = vadd.f32 0.0, %v112
  %v114 = vpop.f32.mrb[0].mxu0
  %115 = vdwg.mxu0
  %v116 = vadd.f32 %v44, %v102
  %v117 = vadd.f32 %v45, %v105
  %v118 = vadd.f32 %v46, %v110
  %v119 = vadd.f32 %v47, %v113
  %v120 = vpack.c.bf16 %v117, %v116
  %v121 = vpack.c.bf16 %v119, %v118
  %v122 = vld [vmem:[%s3] sm:$0xf]
  %v123 = vld [vmem:[%s3 + $0x4] sm:$0xf]
  %v124 = vld [vmem:[%s3 + $0x8] sm:$0xf]
  %v125 = vld [vmem:[%s3 + $0xc] sm:$0xf]
  %v126 = vld [vmem:[%s3 + $0x10] sm:$0xf]
  %v127 = vld [vmem:[%s3 + $0x14] sm:$0xf]
  %v128 = vld [vmem:[%s3 + $0x18] sm:$0xf]
  %v129 = vld [vmem:[%s3 + $0x1c] sm:$0xf]
  %v130 = vld [vmem:[%s3 + $0x20] sm:$0xf]
  %v131 = vld [vmem:[%s3 + $0x24] sm:$0xf]
  %v132 = vld [vmem:[%s3 + $0x28] sm:$0xf]
  %v133 = vld [vmem:[%s3 + $0x2c] sm:$0xf]
  %v134 = vld [vmem:[%s3 + $0x30] sm:$0xf]
  %v135 = vld [vmem:[%s3 + $0x34] sm:$0xf]
  %v136 = vld [vmem:[%s3 + $0x38] sm:$0xf]
  %v137 = vld [vmem:[%s3 + $0x3c] sm:$0xf]
  %v138 = vld [vmem:[%s4] sm:$0x1]
  %v140 = vlaneseq
  %v141 = vshrl.u32 %v140, 7
  %v142 = vsub.s32 0, %v141
  %v143 = vrot.slane %v138, %v142
  %v161 = vunpack.c.l.b16 %v122
  %v162 = vunpack.c.l.b16 %v123
  %v163 = vunpack.c.l.b16 %v124
  %v164 = vunpack.c.l.b16 %v125
  %v165 = vunpack.c.l.b16 %v126
  %v166 = vunpack.c.l.b16 %v127
  %v167 = vunpack.c.l.b16 %v128
  %v168 = vunpack.c.l.b16 %v129
  %v169 = vunpack.c.l.b16 %v130
  %v170 = vunpack.c.l.b16 %v131
  %v171 = vunpack.c.l.b16 %v132
  %v172 = vunpack.c.l.b16 %v133
  %v173 = vunpack.c.l.b16 %v134
  %v174 = vunpack.c.l.b16 %v135
  %v175 = vunpack.c.l.b16 %v136
  %v176 = vunpack.c.l.b16 %v137
  %v177 = vpack.c.b16 %v162, %v161
  %v178 = vpack.c.b16 %v164, %v163
  %v179 = vpack.c.b16 %v166, %v165
  %v180 = vpack.c.b16 %v168, %v167
  %v181 = vpack.c.b16 %v170, %v169
  %v182 = vpack.c.b16 %v172, %v171
  %v183 = vpack.c.b16 %v174, %v173
  %v184 = vpack.c.b16 %v176, %v175
  %193 = vmatprep.subr.bf16.mxu0 0
  %194 = vmatpush1.bf16.msra.mxu0 %v177
  %195 = vmatprep.subr.bf16.mxu0 0
  %196 = vmatpush1.bf16.msra.mxu0 %v178
  %197 = vmatprep.subr.bf16.mxu0 0
  %198 = vmatpush1.bf16.msra.mxu0 %v179
  %199 = vmatprep.subr.bf16.mxu0 0
  %200 = vmatpush1.bf16.msra.mxu0 %v180
  %201 = vmatprep.subr.bf16.mxu0 0
  %202 = vmatpush1.bf16.msra.mxu0 %v181
  %203 = vmatprep.subr.bf16.mxu0 0
  %204 = vmatpush1.bf16.msra.mxu0 %v182
  %205 = vmatprep.subr.bf16.mxu0 0
  %206 = vmatpush1.bf16.msra.mxu0 %v183
  %207 = vmatprep.subr.bf16.mxu0 0
  %208 = vmatpush1.bf16.msra.mxu0 %v184
  %209 = vmatprep.subr.bf16.mxu0 0
  %210 = vmatpush1.bf16.msra.mxu0 0
  %211 = vmatprep.subr.bf16.mxu0 0
  %212 = vmatpush1.bf16.msra.mxu0 0
  %213 = vmatprep.subr.bf16.mxu0 0
  %214 = vmatpush1.bf16.msra.mxu0 0
  %215 = vmatprep.subr.bf16.mxu0 0
  %216 = vmatpush1.bf16.msra.mxu0 0
  %217 = vmatprep.subr.bf16.mxu0 0
  %218 = vmatpush1.bf16.msra.mxu0 0
  %219 = vmatprep.subr.bf16.mxu0 0
  %220 = vmatpush1.bf16.msra.mxu0 0
  %221 = vmatprep.subr.bf16.mxu0 0
  %222 = vmatpush1.bf16.msra.mxu0 0
  %223 = vmatprep.subr.bf16.mxu0 0
  %224 = vmatpush1.bf16.msra.mxu0 0
  %225 = vmatprep.mubr.bf16.mxu0 0
  %226 = vmatmul.mubr.bf16.gmra.mrb[0].mxu0 %v120
  %v227 = vpop.f32.mrb[0].mxu0
  %v228 = vadd.f32 %v143, %v227
  %v229 = vpop.f32.mrb[0].mxu0
  %v230 = vpop.f32.mrb[0].mxu0
  %v231 = vadd.f32 %v143, %v230
  %v232 = vpop.f32.mrb[0].mxu0
  %233 = vmatprep.mubr.bf16.mxu0 0
  %234 = vmatmul.mubr.bf16.gmra.mrb[0].mxu0 %v121
  %v235 = vpop.f32.mrb[0].mxu0
  %v236 = vadd.f32 %v143, %v235
  %v237 = vpop.f32.mrb[0].mxu0
  %v238 = vpop.f32.mrb[0].mxu0
  %v239 = vadd.f32 %v143, %v238
  %v240 = vpop.f32.mrb[0].mxu0
  %241 = vdwg.mxu0
  %v242 = vadd.f32 %v228, %v231
  %v243 = vadd.f32 %v242, %v236
  %v244 = vadd.f32 %v243, %v239
  %v245 = vrot.slane %v244, 4
  %v246 = vadd.f32 %v244, %v245
  %v247 = vrot.slane %v246, 2
  %v248 = vadd.f32 %v246, %v247
  %v249 = vrot.slane %v248, 1
  %v250 = vadd.f32 %v248, %v249
  %v251 = vmul.f32 %v250, 0.03125
  %v252 = vsub.f32 %v228, %v251
  %v253 = vsub.f32 %v231, %v251
  %v254 = vsub.f32 %v236, %v251
  %v255 = vsub.f32 %v239, %v251
  %v256 = vmul.f32 %v252, %v252
  %v257 = vmul.f32 %v253, %v253
  %v258 = vmul.f32 %v254, %v254
  %v259 = vmul.f32 %v255, %v255
  %v260 = vadd.f32 %v256, %v257
  %v261 = vadd.f32 %v260, %v258
  %v262 = vadd.f32 %v261, %v259
  %v263 = vrot.slane %v262, 4
  %v264 = vadd.f32 %v262, %v263
  %v265 = vrot.slane %v264, 2
  %v266 = vadd.f32 %v264, %v265
  %v267 = vrot.slane %v266, 1
  %v268 = vadd.f32 %v266, %v267
  %v269 = vmul.f32 %v268, 0.03125
  %v270 = vadd.f32 %v269, 1e-05
  %v271 = vrsqrt.pop %v270
  %v272 = vmul.f32 %v252, %v271
  %v273 = vmul.f32 %v253, %v271
  %v274 = vmul.f32 %v254, %v271
  %v275 = vmul.f32 %v255, %v271
  %v276 = vld [vmem:[%s5] sm:$0x1]
  %v278 = vlaneseq
  %v279 = vshrl.u32 %v278, 7
  %v280 = vsub.s32 0, %v279
  %v281 = vrot.slane %v276, %v280
  %v283 = vmul.f32 %v272, %v281
  %v284 = vmul.f32 %v273, %v281
  %v285 = vmul.f32 %v274, %v281
  %v286 = vmul.f32 %v275, %v281
  %v287 = vld [vmem:[%s6] sm:$0x1]
  %v289 = vlaneseq
  %v290 = vshrl.u32 %v289, 7
  %v291 = vsub.s32 0, %v290
  %v292 = vrot.slane %v287, %v291
  %v294 = vadd.f32 %v283, %v292
  %v295 = vadd.f32 %v284, %v292
  %v296 = vadd.f32 %v285, %v292
  %v297 = vadd.f32 %v286, %v292
  %v298 = vmax.f32 %v294, 0.0
  %v299 = vmax.f32 %v295, 0.0
  %v300 = vmax.f32 %v296, 0.0
  %v301 = vmax.f32 %v297, 0.0
  %v302 = vpack.c.bf16 %v299, %v298
  %v303 = vpack.c.bf16 %v301, %v300
  %v304 = vld [vmem:[%s7] sm:$0xf]
  %v305 = vld [vmem:[%s7 + $0x4] sm:$0xf]
  %v306 = vld [vmem:[%s7 + $0x8] sm:$0xf]
  %v307 = vld [vmem:[%s7 + $0xc] sm:$0xf]
  %v308 = vld [vmem:[%s7 + $0x10] sm:$0xf]
  %v309 = vld [vmem:[%s7 + $0x14] sm:$0xf]
  %v310 = vld [vmem:[%s7 + $0x18] sm:$0xf]
  %v311 = vld [vmem:[%s7 + $0x1c] sm:$0xf]
  %v312 = vld [vmem:[%s7 + $0x20] sm:$0xf]
  %v313 = vld [vmem:[%s7 + $0x24] sm:$0xf]
  %v314 = vld [vmem:[%s7 + $0x28] sm:$0xf]
  %v315 = vld [vmem:[%s7 + $0x2c] sm:$0xf]
  %v316 = vld [vmem:[%s7 + $0x30] sm:$0xf]
  %v317 = vld [vmem:[%s7 + $0x34] sm:$0xf]
  %v318 = vld [vmem:[%s7 + $0x38] sm:$0xf]
  %v319 = vld [vmem:[%s7 + $0x3c] sm:$0xf]
  %v320 = vld [vmem:[%s8] sm:$0x1]
  %v322 = vlaneseq
  %v323 = vshrl.u32 %v322, 7
  %v324 = vsub.s32 0, %v323
  %v325 = vrot.slane %v320, %v324
  %v343 = vunpack.c.l.b16 %v304
  %v344 = vunpack.c.l.b16 %v305
  %v345 = vunpack.c.l.b16 %v306
  %v346 = vunpack.c.l.b16 %v307
  %v347 = vunpack.c.l.b16 %v308
  %v348 = vunpack.c.l.b16 %v309
  %v349 = vunpack.c.l.b16 %v310
  %v350 = vunpack.c.l.b16 %v311
  %v351 = vunpack.c.l.b16 %v312
  %v352 = vunpack.c.l.b16 %v313
  %v353 = vunpack.c.l.b16 %v314
  %v354 = vunpack.c.l.b16 %v315
  %v355 = vunpack.c.l.b16 %v316
  %v356 = vunpack.c.l.b16 %v317
  %v357 = vunpack.c.l.b16 %v318
  %v358 = vunpack.c.l.b16 %v319
  %v359 = vpack.c.b16 %v344, %v343
  %v360 = vpack.c.b16 %v346, %v345
  %v361 = vpack.c.b16 %v348, %v347
  %v362 = vpack.c.b16 %v350, %v349
  %v363 = vpack.c.b16 %v352, %v351
  %v364 = vpack.c.b16 %v354, %v353
  %v365 = vpack.c.b16 %v356, %v355
  %v366 = vpack.c.b16 %v358, %v357
  %375 = vmatprep.subr.bf16.mxu0 0
  %376 = vmatpush1.bf16.msra.mxu0 %v359
  %377 = vmatprep.subr.bf16.mxu0 0
  %378 = vmatpush1.bf16.msra.mxu0 %v360
  %379 = vmatprep.subr.bf16.mxu0 0
  %380 = vmatpush1.bf16.msra.mxu0 %v361
  %381 = vmatprep.subr.bf16.mxu0 0
  %382 = vmatpush1.bf16.msra.mxu0 %v362
  %383 = vmatprep.subr.bf16.mxu0 0
  %384 = vmatpush1.bf16.msra.mxu0 %v363
  %385 = vmatprep.subr.bf16.mxu0 0
  %386 = vmatpush1.bf16.msra.mxu0 %v364
  %387 = vmatprep.subr.bf16.mxu0 0
  %388 = vmatpush1.bf16.msra.mxu0 %v365
  %389 = vmatprep.subr.bf16.mxu0 0
  %390 = vmatpush1.bf16.msra.mxu0 %v366
  %391 = vmatprep.subr.bf16.mxu0 0
  %392 = vmatpush1.bf16.msra.mxu0 0
  %393 = vmatprep.subr.bf16.mxu0 0
  %394 = vmatpush1.bf16.msra.mxu0 0
  %395 = vmatprep.subr.bf16.mxu0 0
  %396 = vmatpush1.bf16.msra.mxu0 0
  %397 = vmatprep.subr.bf16.mxu0 0
  %398 = vmatpush1.bf16.msra.mxu0 0
  %399 = vmatprep.subr.bf16.mxu0 0
  %400 = vmatpush1.bf16.msra.mxu0 0
  %401 = vmatprep.subr.bf16.mxu0 0
  %402 = vmatpush1.bf16.msra.mxu0 0
  %403 = vmatprep.subr.bf16.mxu0 0
  %404 = vmatpush1.bf16.msra.mxu0 0
  %405 = vmatprep.subr.bf16.mxu0 0
  %406 = vmatpush1.bf16.msra.mxu0 0
  %407 = vmatprep.mubr.bf16.mxu0 0
  %408 = vmatmul.mubr.bf16.gmra.mrb[0].mxu0 %v302
  %v409 = vpop.f32.mrb[0].mxu0
  %v410 = vadd.f32 %v325, %v409
  %v411 = vpop.f32.mrb[0].mxu0
  %v412 = vpop.f32.mrb[0].mxu0
  %v413 = vadd.f32 %v325, %v412
  %v414 = vpop.f32.mrb[0].mxu0
  %415 = vmatprep.mubr.bf16.mxu0 0
  %416 = vmatmul.mubr.bf16.gmra.mrb[0].mxu0 %v303
  %v417 = vpop.f32.mrb[0].mxu0
  %v418 = vadd.f32 %v325, %v417
  %v419 = vpop.f32.mrb[0].mxu0
  %v420 = vpop.f32.mrb[0].mxu0
  %v421 = vadd.f32 %v325, %v420
  %v422 = vpop.f32.mrb[0].mxu0
  %423 = vdwg.mxu0
  %v424 = vmax.f32 %v410, 0.0
  %v425 = vmax.f32 %v413, 0.0
  %v426 = vmax.f32 %v418, 0.0
  %v427 = vmax.f32 %v421, 0.0
  %v428 = vpack.c.bf16 %v425, %v424
  %v429 = vpack.c.bf16 %v427, %v426
  %v431 = vsel %vm60, %v43, 0
  %433 = vmatprep.subr.bf16.mxu0 0
  %434 = vmatpush1.bf16.msra.mxu0 %v428
  %435 = vmatprep.subr.bf16.mxu0 0
  %436 = vmatpush1.bf16.msra.mxu0 %v429
  %437 = vmatprep.subr.bf16.mxu0 0
  %438 = vmatpush1.bf16.msra.mxu0 0
  %439 = vmatprep.subr.bf16.mxu0 0
  %440 = vmatpush1.bf16.msra.mxu0 0
  %441 = vmatprep.subr.bf16.mxu0 0
  %442 = vmatpush1.bf16.msra.mxu0 0
  %443 = vmatprep.subr.bf16.mxu0 0
  %444 = vmatpush1.bf16.msra.mxu0 0
  %445 = vmatprep.subr.bf16.mxu0 0
  %446 = vmatpush1.bf16.msra.mxu0 0
  %447 = vmatprep.subr.bf16.mxu0 0
  %448 = vmatpush1.bf16.msra.mxu0 0
  %449 = vmatprep.subr.bf16.mxu0 0
  %450 = vmatpush1.bf16.msra.mxu0 0
  %451 = vmatprep.subr.bf16.mxu0 0
  %452 = vmatpush1.bf16.msra.mxu0 0
  %453 = vmatprep.subr.bf16.mxu0 0
  %454 = vmatpush1.bf16.msra.mxu0 0
  %455 = vmatprep.subr.bf16.mxu0 0
  %456 = vmatpush1.bf16.msra.mxu0 0
  %457 = vmatprep.subr.bf16.mxu0 0
  %458 = vmatpush1.bf16.msra.mxu0 0
  %459 = vmatprep.subr.bf16.mxu0 0
  %460 = vmatpush1.bf16.msra.mxu0 0
  %461 = vmatprep.subr.bf16.mxu0 0
  %462 = vmatpush1.bf16.msra.mxu0 0
  %463 = vmatprep.subr.bf16.mxu0 0
  %464 = vmatpush1.bf16.msra.mxu0 0
  %465 = vmatprep.mubr.bf16.mxu0 0
  %466 = vmatmul.mubr.bf16.gmra.mrb[0].mxu0 %v431
  %v467 = vpop.f32.mrb[0].mxu0
  %v468 = vadd.f32 0.0, %v467
  %v469 = vpop.f32.mrb[0].mxu0
  %v470 = vpop.f32.mrb[0].mxu0
  %v471 = vpop.f32.mrb[0].mxu0
  %472 = vdwg.mxu0
  %v473 = vpack.c.bf16 %v468, %v468
  %v474 = vld [vmem:[%s9] sm:$0xf]
  %v475 = vld [vmem:[%s9 + $0x4] sm:$0xf]
  %v476 = vld [vmem:[%s9 + $0x8] sm:$0xf]
  %v477 = vld [vmem:[%s9 + $0xc] sm:$0xf]
  %v478 = vld [vmem:[%s9 + $0x10] sm:$0xf]
  %v479 = vld [vmem:[%s9 + $0x14] sm:$0xf]
  %v480 = vld [vmem:[%s9 + $0x18] sm:$0xf]
  %v481 = vld [vmem:[%s9 + $0x1c] sm:$0xf]
  %v482 = vld [vmem:[%s9 + $0x20] sm:$0xf]
  %v483 = vld [vmem:[%s9 + $0x24] sm:$0xf]
  %v484 = vld [vmem:[%s9 + $0x28] sm:$0xf]
  %v485 = vld [vmem:[%s9 + $0x2c] sm:$0xf]
  %v486 = vld [vmem:[%s9 + $0x30] sm:$0xf]
  %v487 = vld [vmem:[%s9 + $0x34] sm:$0xf]
  %v488 = vld [vmem:[%s9 + $0x38] sm:$0xf]
  %v489 = vld [vmem:[%s9 + $0x3c] sm:$0xf]
  %490 = vmatprep.subr.bf16.mxu0 0
  %491 = vmatpush1.bf16.msra.mxu0 %v428
  %492 = vmatprep.subr.bf16.mxu0 0
  %493 = vmatpush1.bf16.msra.mxu0 %v429
  %494 = vmatprep.subr.bf16.mxu0 0
  %495 = vmatpush1.bf16.msra.mxu0 0
  %496 = vmatprep.subr.bf16.mxu0 0
  %497 = vmatpush1.bf16.msra.mxu0 0
  %498 = vmatprep.subr.bf16.mxu0 0
  %499 = vmatpush1.bf16.msra.mxu0 0
  %500 = vmatprep.subr.bf16.mxu0 0
  %501 = vmatpush1.bf16.msra.mxu0 0
  %502 = vmatprep.subr.bf16.mxu0 0
  %503 = vmatpush1.bf16.msra.mxu0 0
  %504 = vmatprep.subr.bf16.mxu0 0
  %505 = vmatpush1.bf16.msra.mxu0 0
  %506 = vmatprep.subr.bf16.mxu0 0
  %507 = vmatpush1.bf16.msra.mxu0 0
  %508 = vmatprep.subr.bf16.mxu0 0
  %509 = vmatpush1.bf16.msra.mxu0 0
  %510 = vmatprep.subr.bf16.mxu0 0
  %511 = vmatpush1.bf16.msra.mxu0 0
  %512 = vmatprep.subr.bf16.mxu0 0
  %513 = vmatpush1.bf16.msra.mxu0 0
  %514 = vmatprep.subr.bf16.mxu0 0
  %515 = vmatpush1.bf16.msra.mxu0 0
  %516 = vmatprep.subr.bf16.mxu0 0
  %517 = vmatpush1.bf16.msra.mxu0 0
  %518 = vmatprep.subr.bf16.mxu0 0
  %519 = vmatpush1.bf16.msra.mxu0 0
  %520 = vmatprep.subr.bf16.mxu0 0
  %521 = vmatpush1.bf16.msra.mxu0 0
  %522 = vmatprep.mubr.bf16.mxu0 0
  %523 = vmatmul.mubr.bf16.gmra.mrb[0].mxu0 %v62
  %v524 = vpop.f32.mrb[0].mxu0
  %v525 = vadd.f32 0.0, %v524
  %v526 = vpop.f32.mrb[0].mxu0
  %v527 = vpop.f32.mrb[0].mxu0
  %v528 = vadd.f32 0.0, %v527
  %v529 = vpop.f32.mrb[0].mxu0
  %530 = vmatprep.mubr.bf16.mxu0 0
  %531 = vmatmul.mubr.bf16.gmra.mrb[0].mxu0 %v65
  %v532 = vpop.f32.mrb[0].mxu0
  %v533 = vadd.f32 0.0, %v532
  %v534 = vpop.f32.mrb[0].mxu0
  %v535 = vpop.f32.mrb[0].mxu0
  %v536 = vadd.f32 0.0, %v535
  %v537 = vpop.f32.mrb[0].mxu0
  %538 = vdwg.mxu0
  %v539 = vadd.f32 %v424, %v525
  %v540 = vadd.f32 %v425, %v528
  %v541 = vadd.f32 %v426, %v533
  %v542 = vadd.f32 %v427, %v536
  %v543 = vpack.c.bf16 %v540, %v539
  %v544 = vpack.c.bf16 %v542, %v541
  %s545 = scalar_lea.vmem %s3, 64
  %v546 = vld [vmem:[%s545] sm:$0xf]
  %v547 = vld [vmem:[%s545 + $0x4] sm:$0xf]
  %v548 = vld [vmem:[%s545 + $0x8] sm:$0xf]
  %v549 = vld [vmem:[%s545 + $0xc] sm:$0xf]
  %v550 = vld [vmem:[%s545 + $0x10] sm:$0xf]
  %v551 = vld [vmem:[%s545 + $0x14] sm:$0xf]
  %v552 = vld [vmem:[%s545 + $0x18] sm:$0xf]
  %v553 = vld [vmem:[%s545 + $0x1c] sm:$0xf]
  %v554 = vld [vmem:[%s545 + $0x20] sm:$0xf]
  %v555 = vld [vmem:[%s545 + $0x24] sm:$0xf]
  %v556 = vld [vmem:[%s545 + $0x28] sm:$0xf]
  %v557 = vld [vmem:[%s545 + $0x2c] sm:$0xf]
  %v558 = vld [vmem:[%s545 + $0x30] sm:$0xf]
  %v559 = vld [vmem:[%s545 + $0x34] sm:$0xf]
  %v560 = vld [vmem:[%s545 + $0x38] sm:$0xf]
  %v561 = vld [vmem:[%s545 + $0x3c] sm:$0xf]
  %s562 = scalar_lea.vmem %s4, 1
  %v563 = vld [vmem:[%s562] sm:$0x1]
  %v565 = vlaneseq
  %v566 = vshrl.u32 %v565, 7
  %v567 = vsub.s32 0, %v566
  %v568 = vrot.slane %v563, %v567
  %v586 = vunpack.c.l.b16 %v546
  %v587 = vunpack.c.l.b16 %v547
  %v588 = vunpack.c.l.b16 %v548
  %v589 = vunpack.c.l.b16 %v549
  %v590 = vunpack.c.l.b16 %v550
  %v591 = vunpack.c.l.b16 %v551
  %v592 = vunpack.c.l.b16 %v552
  %v593 = vunpack.c.l.b16 %v553
  %v594 = vunpack.c.l.b16 %v554
  %v595 = vunpack.c.l.b16 %v555
  %v596 = vunpack.c.l.b16 %v556
  %v597 = vunpack.c.l.b16 %v557
  %v598 = vunpack.c.l.b16 %v558
  %v599 = vunpack.c.l.b16 %v559
  %v600 = vunpack.c.l.b16 %v560
  %v601 = vunpack.c.l.b16 %v561
  %v602 = vpack.c.b16 %v587, %v586
  %v603 = vpack.c.b16 %v589, %v588
  %v604 = vpack.c.b16 %v591, %v590
  %v605 = vpack.c.b16 %v593, %v592
  %v606 = vpack.c.b16 %v595, %v594
  %v607 = vpack.c.b16 %v597, %v596
  %v608 = vpack.c.b16 %v599, %v598
  %v609 = vpack.c.b16 %v601, %v600
  %618 = vmatprep.subr.bf16.mxu0 0
  %619 = vmatpush1.bf16.msra.mxu0 %v602
  %620 = vmatprep.subr.bf16.mxu0 0
  %621 = vmatpush1.bf16.msra.mxu0 %v603
  %622 = vmatprep.subr.bf16.mxu0 0
  %623 = vmatpush1.bf16.msra.mxu0 %v604
  %624 = vmatprep.subr.bf16.mxu0 0
  %625 = vmatpush1.bf16.msra.mxu0 %v605
  %626 = vmatprep.subr.bf16.mxu0 0
  %627 = vmatpush1.bf16.msra.mxu0 %v606
  %628 = vmatprep.subr.bf16.mxu0 0
  %629 = vmatpush1.bf16.msra.mxu0 %v607
  %630 = vmatprep.subr.bf16.mxu0 0
  %631 = vmatpush1.bf16.msra.mxu0 %v608
  %632 = vmatprep.subr.bf16.mxu0 0
  %633 = vmatpush1.bf16.msra.mxu0 %v609
  %634 = vmatprep.subr.bf16.mxu0 0
  %635 = vmatpush1.bf16.msra.mxu0 0
  %636 = vmatprep.subr.bf16.mxu0 0
  %637 = vmatpush1.bf16.msra.mxu0 0
  %638 = vmatprep.subr.bf16.mxu0 0
  %639 = vmatpush1.bf16.msra.mxu0 0
  %640 = vmatprep.subr.bf16.mxu0 0
  %641 = vmatpush1.bf16.msra.mxu0 0
  %642 = vmatprep.subr.bf16.mxu0 0
  %643 = vmatpush1.bf16.msra.mxu0 0
  %644 = vmatprep.subr.bf16.mxu0 0
  %645 = vmatpush1.bf16.msra.mxu0 0
  %646 = vmatprep.subr.bf16.mxu0 0
  %647 = vmatpush1.bf16.msra.mxu0 0
  %648 = vmatprep.subr.bf16.mxu0 0
  %649 = vmatpush1.bf16.msra.mxu0 0
  %650 = vmatprep.mubr.bf16.mxu0 0
  %651 = vmatmul.mubr.bf16.gmra.mrb[0].mxu0 %v543
  %v652 = vpop.f32.mrb[0].mxu0
  %v653 = vadd.f32 %v568, %v652
  %v654 = vpop.f32.mrb[0].mxu0
  %v655 = vpop.f32.mrb[0].mxu0
  %v656 = vadd.f32 %v568, %v655
  %v657 = vpop.f32.mrb[0].mxu0
  %658 = vmatprep.mubr.bf16.mxu0 0
  %659 = vmatmul.mubr.bf16.gmra.mrb[0].mxu0 %v544
  %v660 = vpop.f32.mrb[0].mxu0
  %v661 = vadd.f32 %v568, %v660
  %v662 = vpop.f32.mrb[0].mxu0
  %v663 = vpop.f32.mrb[0].mxu0
  %v664 = vadd.f32 %v568, %v663
  %v665 = vpop.f32.mrb[0].mxu0
  %666 = vdwg.mxu0
  %v667 = vadd.f32 %v653, %v656
  %v668 = vadd.f32 %v667, %v661
  %v669 = vadd.f32 %v668, %v664
  %v670 = vrot.slane %v669, 4
  %v671 = vadd.f32 %v669, %v670
  %v672 = vrot.slane %v671, 2
  %v673 = vadd.f32 %v671, %v672
  %v674 = vrot.slane %v673, 1
  %v675 = vadd.f32 %v673, %v674
  %v676 = vmul.f32 %v675, 0.03125
  %v677 = vsub.f32 %v653, %v676
  %v678 = vsub.f32 %v656, %v676
  %v679 = vsub.f32 %v661, %v676
  %v680 = vsub.f32 %v664, %v676
  %v681 = vmul.f32 %v677, %v677
  %v682 = vmul.f32 %v678, %v678
  %v683 = vmul.f32 %v679, %v679
  %v684 = vmul.f32 %v680, %v680
  %v685 = vadd.f32 %v681, %v682
  %v686 = vadd.f32 %v685, %v683
  %v687 = vadd.f32 %v686, %v684
  %v688 = vrot.slane %v687, 4
  %v689 = vadd.f32 %v687, %v688
  %v690 = vrot.slane %v689, 2
  %v691 = vadd.f32 %v689, %v690
  %v692 = vrot.slane %v691, 1
  %v693 = vadd.f32 %v691, %v692
  %v694 = vmul.f32 %v693, 0.03125
  %v695 = vadd.f32 %v694, 1e-05
  %v696 = vrsqrt.pop %v695
  %v697 = vmul.f32 %v677, %v696
  %v698 = vmul.f32 %v678, %v696
  %v699 = vmul.f32 %v679, %v696
  %v700 = vmul.f32 %v680, %v696
  %s701 = scalar_lea.vmem %s5, 1
  %v702 = vld [vmem:[%s701] sm:$0x1]
  %v704 = vlaneseq
  %v705 = vshrl.u32 %v704, 7
  %v706 = vsub.s32 0, %v705
  %v707 = vrot.slane %v702, %v706
  %v709 = vmul.f32 %v697, %v707
  %v710 = vmul.f32 %v698, %v707
  %v711 = vmul.f32 %v699, %v707
  %v712 = vmul.f32 %v700, %v707
  %s713 = scalar_lea.vmem %s6, 1
  %v714 = vld [vmem:[%s713] sm:$0x1]
  %v716 = vlaneseq
  %v717 = vshrl.u32 %v716, 7
  %v718 = vsub.s32 0, %v717
  %v719 = vrot.slane %v714, %v718
  %v721 = vadd.f32 %v709, %v719
  %v722 = vadd.f32 %v710, %v719
  %v723 = vadd.f32 %v711, %v719
  %v724 = vadd.f32 %v712, %v719
  %v725 = vmax.f32 %v721, 0.0
  %v726 = vmax.f32 %v722, 0.0
  %v727 = vmax.f32 %v723, 0.0
  %v728 = vmax.f32 %v724, 0.0
  %v729 = vpack.c.bf16 %v726, %v725
  %v730 = vpack.c.bf16 %v728, %v727
  %s731 = scalar_lea.vmem %s7, 64
  %v732 = vld [vmem:[%s731] sm:$0xf]
  %v733 = vld [vmem:[%s731 + $0x4] sm:$0xf]
  %v734 = vld [vmem:[%s731 + $0x8] sm:$0xf]
  %v735 = vld [vmem:[%s731 + $0xc] sm:$0xf]
  %v736 = vld [vmem:[%s731 + $0x10] sm:$0xf]
  %v737 = vld [vmem:[%s731 + $0x14] sm:$0xf]
  %v738 = vld [vmem:[%s731 + $0x18] sm:$0xf]
  %v739 = vld [vmem:[%s731 + $0x1c] sm:$0xf]
  %v740 = vld [vmem:[%s731 + $0x20] sm:$0xf]
  %v741 = vld [vmem:[%s731 + $0x24] sm:$0xf]
  %v742 = vld [vmem:[%s731 + $0x28] sm:$0xf]
  %v743 = vld [vmem:[%s731 + $0x2c] sm:$0xf]
  %v744 = vld [vmem:[%s731 + $0x30] sm:$0xf]
  %v745 = vld [vmem:[%s731 + $0x34] sm:$0xf]
  %v746 = vld [vmem:[%s731 + $0x38] sm:$0xf]
  %v747 = vld [vmem:[%s731 + $0x3c] sm:$0xf]
  %s748 = scalar_lea.vmem %s8, 1
  %v749 = vld [vmem:[%s748] sm:$0x1]
  %v751 = vlaneseq
  %v752 = vshrl.u32 %v751, 7
  %v753 = vsub.s32 0, %v752
  %v754 = vrot.slane %v749, %v753
  %v772 = vunpack.c.l.b16 %v732
  %v773 = vunpack.c.l.b16 %v733
  %v774 = vunpack.c.l.b16 %v734
  %v775 = vunpack.c.l.b16 %v735
  %v776 = vunpack.c.l.b16 %v736
  %v777 = vunpack.c.l.b16 %v737
  %v778 = vunpack.c.l.b16 %v738
  %v779 = vunpack.c.l.b16 %v739
  %v780 = vunpack.c.l.b16 %v740
  %v781 = vunpack.c.l.b16 %v741
  %v782 = vunpack.c.l.b16 %v742
  %v783 = vunpack.c.l.b16 %v743
  %v784 = vunpack.c.l.b16 %v744
  %v785 = vunpack.c.l.b16 %v745
  %v786 = vunpack.c.l.b16 %v746
  %v787 = vunpack.c.l.b16 %v747
  %v788 = vpack.c.b16 %v773, %v772
  %v789 = vpack.c.b16 %v775, %v774
  %v790 = vpack.c.b16 %v777, %v776
  %v791 = vpack.c.b16 %v779, %v778
  %v792 = vpack.c.b16 %v781, %v780
  %v793 = vpack.c.b16 %v783, %v782
  %v794 = vpack.c.b16 %v785, %v784
  %v795 = vpack.c.b16 %v787, %v786
  %804 = vmatprep.subr.bf16.mxu0 0
  %805 = vmatpush1.bf16.msra.mxu0 %v788
  %806 = vmatprep.subr.bf16.mxu0 0
  %807 = vmatpush1.bf16.msra.mxu0 %v789
  %808 = vmatprep.subr.bf16.mxu0 0
  %809 = vmatpush1.bf16.msra.mxu0 %v790
  %810 = vmatprep.subr.bf16.mxu0 0
  %811 = vmatpush1.bf16.msra.mxu0 %v791
  %812 = vmatprep.subr.bf16.mxu0 0
  %813 = vmatpush1.bf16.msra.mxu0 %v792
  %814 = vmatprep.subr.bf16.mxu0 0
  %815 = vmatpush1.bf16.msra.mxu0 %v793
  %816 = vmatprep.subr.bf16.mxu0 0
  %817 = vmatpush1.bf16.msra.mxu0 %v794
  %818 = vmatprep.subr.bf16.mxu0 0
  %819 = vmatpush1.bf16.msra.mxu0 %v795
  %820 = vmatprep.subr.bf16.mxu0 0
  %821 = vmatpush1.bf16.msra.mxu0 0
  %822 = vmatprep.subr.bf16.mxu0 0
  %823 = vmatpush1.bf16.msra.mxu0 0
  %824 = vmatprep.subr.bf16.mxu0 0
  %825 = vmatpush1.bf16.msra.mxu0 0
  %826 = vmatprep.subr.bf16.mxu0 0
  %827 = vmatpush1.bf16.msra.mxu0 0
  %828 = vmatprep.subr.bf16.mxu0 0
  %829 = vmatpush1.bf16.msra.mxu0 0
  %830 = vmatprep.subr.bf16.mxu0 0
  %831 = vmatpush1.bf16.msra.mxu0 0
  %832 = vmatprep.subr.bf16.mxu0 0
  %833 = vmatpush1.bf16.msra.mxu0 0
  %834 = vmatprep.subr.bf16.mxu0 0
  %835 = vmatpush1.bf16.msra.mxu0 0
  %836 = vmatprep.mubr.bf16.mxu0 0
  %837 = vmatmul.mubr.bf16.gmra.mrb[0].mxu0 %v729
  %v838 = vpop.f32.mrb[0].mxu0
  %v839 = vadd.f32 %v754, %v838
  %v840 = vpop.f32.mrb[0].mxu0
  %v841 = vpop.f32.mrb[0].mxu0
  %v842 = vadd.f32 %v754, %v841
  %v843 = vpop.f32.mrb[0].mxu0
  %844 = vmatprep.mubr.bf16.mxu0 0
  %845 = vmatmul.mubr.bf16.gmra.mrb[0].mxu0 %v730
  %v846 = vpop.f32.mrb[0].mxu0
  %v847 = vadd.f32 %v754, %v846
  %v848 = vpop.f32.mrb[0].mxu0
  %v849 = vpop.f32.mrb[0].mxu0
  %v850 = vadd.f32 %v754, %v849
  %v851 = vpop.f32.mrb[0].mxu0
  %852 = vdwg.mxu0
  %v853 = vmax.f32 %v839, 0.0
  %v854 = vmax.f32 %v842, 0.0
  %v855 = vmax.f32 %v847, 0.0
  %v856 = vmax.f32 %v850, 0.0
  %v857 = vpack.c.bf16 %v854, %v853
  %v858 = vpack.c.bf16 %v856, %v855
  %859 = vmatprep.subr.bf16.mxu0 0
  %860 = vmatpush1.bf16.msra.mxu0 %v857
  %861 = vmatprep.subr.bf16.mxu0 0
  %862 = vmatpush1.bf16.msra.mxu0 %v858
  %863 = vmatprep.subr.bf16.mxu0 0
  %864 = vmatpush1.bf16.msra.mxu0 0
  %865 = vmatprep.subr.bf16.mxu0 0
  %866 = vmatpush1.bf16.msra.mxu0 0
  %867 = vmatprep.subr.bf16.mxu0 0
  %868 = vmatpush1.bf16.msra.mxu0 0
  %869 = vmatprep.subr.bf16.mxu0 0
  %870 = vmatpush1.bf16.msra.mxu0 0
  %871 = vmatprep.subr.bf16.mxu0 0
  %872 = vmatpush1.bf16.msra.mxu0 0
  %873 = vmatprep.subr.bf16.mxu0 0
  %874 = vmatpush1.bf16.msra.mxu0 0
  %875 = vmatprep.subr.bf16.mxu0 0
  %876 = vmatpush1.bf16.msra.mxu0 0
  %877 = vmatprep.subr.bf16.mxu0 0
  %878 = vmatpush1.bf16.msra.mxu0 0
  %879 = vmatprep.subr.bf16.mxu0 0
  %880 = vmatpush1.bf16.msra.mxu0 0
  %881 = vmatprep.subr.bf16.mxu0 0
  %882 = vmatpush1.bf16.msra.mxu0 0
  %883 = vmatprep.subr.bf16.mxu0 0
  %884 = vmatpush1.bf16.msra.mxu0 0
  %885 = vmatprep.subr.bf16.mxu0 0
  %886 = vmatpush1.bf16.msra.mxu0 0
  %887 = vmatprep.subr.bf16.mxu0 0
  %888 = vmatpush1.bf16.msra.mxu0 0
  %889 = vmatprep.subr.bf16.mxu0 0
  %890 = vmatpush1.bf16.msra.mxu0 0
  %891 = vmatprep.mubr.bf16.mxu0 0
  %892 = vmatmul.mubr.bf16.gmra.mrb[0].mxu0 %v431
  %v893 = vpop.f32.mrb[0].mxu0
  %v894 = vadd.f32 0.0, %v893
  %v895 = vpop.f32.mrb[0].mxu0
  %v896 = vpop.f32.mrb[0].mxu0
  %v897 = vpop.f32.mrb[0].mxu0
  %898 = vdwg.mxu0
  %v899 = vpack.c.bf16 %v894, %v894
  %s900 = scalar_lea.vmem %s9, 64
  %v901 = vld [vmem:[%s900] sm:$0xf]
  %v902 = vld [vmem:[%s900 + $0x4] sm:$0xf]
  %v903 = vld [vmem:[%s900 + $0x8] sm:$0xf]
  %v904 = vld [vmem:[%s900 + $0xc] sm:$0xf]
  %v905 = vld [vmem:[%s900 + $0x10] sm:$0xf]
  %v906 = vld [vmem:[%s900 + $0x14] sm:$0xf]
  %v907 = vld [vmem:[%s900 + $0x18] sm:$0xf]
  %v908 = vld [vmem:[%s900 + $0x1c] sm:$0xf]
  %v909 = vld [vmem:[%s900 + $0x20] sm:$0xf]
  %v910 = vld [vmem:[%s900 + $0x24] sm:$0xf]
  %v911 = vld [vmem:[%s900 + $0x28] sm:$0xf]
  %v912 = vld [vmem:[%s900 + $0x2c] sm:$0xf]
  %v913 = vld [vmem:[%s900 + $0x30] sm:$0xf]
  %v914 = vld [vmem:[%s900 + $0x34] sm:$0xf]
  %v915 = vld [vmem:[%s900 + $0x38] sm:$0xf]
  %v916 = vld [vmem:[%s900 + $0x3c] sm:$0xf]
  %v933 = vunpack.c.l.b16 %v901
  %v934 = vunpack.c.l.b16 %v902
  %v935 = vunpack.c.l.b16 %v903
  %v936 = vunpack.c.l.b16 %v904
  %v937 = vunpack.c.l.b16 %v905
  %v938 = vunpack.c.l.b16 %v906
  %v939 = vunpack.c.l.b16 %v907
  %v940 = vunpack.c.l.b16 %v908
  %v941 = vunpack.c.l.b16 %v909
  %v942 = vunpack.c.l.b16 %v910
  %v943 = vunpack.c.l.b16 %v911
  %v944 = vunpack.c.l.b16 %v912
  %v945 = vunpack.c.l.b16 %v913
  %v946 = vunpack.c.l.b16 %v914
  %v947 = vunpack.c.l.b16 %v915
  %v948 = vunpack.c.l.b16 %v916
  %v949 = vpack.c.b16 %v934, %v933
  %v950 = vpack.c.b16 %v936, %v935
  %v951 = vpack.c.b16 %v938, %v937
  %v952 = vpack.c.b16 %v940, %v939
  %v953 = vpack.c.b16 %v942, %v941
  %v954 = vpack.c.b16 %v944, %v943
  %v955 = vpack.c.b16 %v946, %v945
  %v956 = vpack.c.b16 %v948, %v947
  %965 = vmatprep.subr.bf16.mxu0 0
  %966 = vmatpush1.bf16.msra.mxu0 %v949
  %967 = vmatprep.subr.bf16.mxu0 0
  %968 = vmatpush1.bf16.msra.mxu0 %v950
  %969 = vmatprep.subr.bf16.mxu0 0
  %970 = vmatpush1.bf16.msra.mxu0 %v951
  %971 = vmatprep.subr.bf16.mxu0 0
  %972 = vmatpush1.bf16.msra.mxu0 %v952
  %973 = vmatprep.subr.bf16.mxu0 0
  %974 = vmatpush1.bf16.msra.mxu0 %v953
  %975 = vmatprep.subr.bf16.mxu0 0
  %976 = vmatpush1.bf16.msra.mxu0 %v954
  %977 = vmatprep.subr.bf16.mxu0 0
  %978 = vmatpush1.bf16.msra.mxu0 %v955
  %979 = vmatprep.subr.bf16.mxu0 0
  %980 = vmatpush1.bf16.msra.mxu0 %v956
  %981 = vmatprep.subr.bf16.mxu0 0
  %982 = vmatpush1.bf16.msra.mxu0 0
  %983 = vmatprep.subr.bf16.mxu0 0
  %984 = vmatpush1.bf16.msra.mxu0 0
  %985 = vmatprep.subr.bf16.mxu0 0
  %986 = vmatpush1.bf16.msra.mxu0 0
  %987 = vmatprep.subr.bf16.mxu0 0
  %988 = vmatpush1.bf16.msra.mxu0 0
  %989 = vmatprep.subr.bf16.mxu0 0
  %990 = vmatpush1.bf16.msra.mxu0 0
  %991 = vmatprep.subr.bf16.mxu0 0
  %992 = vmatpush1.bf16.msra.mxu0 0
  %993 = vmatprep.subr.bf16.mxu0 0
  %994 = vmatpush1.bf16.msra.mxu0 0
  %995 = vmatprep.subr.bf16.mxu0 0
  %996 = vmatpush1.bf16.msra.mxu0 0
  %997 = vmatprep.mubr.bf16.mxu0 0
  %998 = vmatmul.mubr.bf16.gmra.mrb[0].mxu0 %v899
  %v999 = vpop.f32.mrb[0].mxu0
  %v1000 = vadd.f32 0.0, %v999
  %v1001 = vpop.f32.mrb[0].mxu0
  %v1002 = vpop.f32.mrb[0].mxu0
  %v1003 = vpop.f32.mrb[0].mxu0
  %1004 = vdwg.mxu0
  %v1021 = vunpack.c.l.b16 %v474
  %v1022 = vunpack.c.l.b16 %v475
  %v1023 = vunpack.c.l.b16 %v476
  %v1024 = vunpack.c.l.b16 %v477
  %v1025 = vunpack.c.l.b16 %v478
  %v1026 = vunpack.c.l.b16 %v479
  %v1027 = vunpack.c.l.b16 %v480
  %v1028 = vunpack.c.l.b16 %v481
  %v1029 = vunpack.c.l.b16 %v482
  %v1030 = vunpack.c.l.b16 %v483
  %v1031 = vunpack.c.l.b16 %v484
  %v1032 = vunpack.c.l.b16 %v485
  %v1033 = vunpack.c.l.b16 %v486
  %v1034 = vunpack.c.l.b16 %v487
  %v1035 = vunpack.c.l.b16 %v488
  %v1036 = vunpack.c.l.b16 %v489
  %v1037 = vpack.c.b16 %v1022, %v1021
  %v1038 = vpack.c.b16 %v1024, %v1023
  %v1039 = vpack.c.b16 %v1026, %v1025
  %v1040 = vpack.c.b16 %v1028, %v1027
  %v1041 = vpack.c.b16 %v1030, %v1029
  %v1042 = vpack.c.b16 %v1032, %v1031
  %v1043 = vpack.c.b16 %v1034, %v1033
  %v1044 = vpack.c.b16 %v1036, %v1035
  %1053 = vmatprep.subr.bf16.mxu0 0
  %1054 = vmatpush1.bf16.msra.mxu0 %v1037
  %1055 = vmatprep.subr.bf16.mxu0 0
  %1056 = vmatpush1.bf16.msra.mxu0 %v1038
  %1057 = vmatprep.subr.bf16.mxu0 0
  %1058 = vmatpush1.bf16.msra.mxu0 %v1039
  %1059 = vmatprep.subr.bf16.mxu0 0
  %1060 = vmatpush1.bf16.msra.mxu0 %v1040
  %1061 = vmatprep.subr.bf16.mxu0 0
  %1062 = vmatpush1.bf16.msra.mxu0 %v1041
  %1063 = vmatprep.subr.bf16.mxu0 0
  %1064 = vmatpush1.bf16.msra.mxu0 %v1042
  %1065 = vmatprep.subr.bf16.mxu0 0
  %1066 = vmatpush1.bf16.msra.mxu0 %v1043
  %1067 = vmatprep.subr.bf16.mxu0 0
  %1068 = vmatpush1.bf16.msra.mxu0 %v1044
  %1069 = vmatprep.subr.bf16.mxu0 0
  %1070 = vmatpush1.bf16.msra.mxu0 0
  %1071 = vmatprep.subr.bf16.mxu0 0
  %1072 = vmatpush1.bf16.msra.mxu0 0
  %1073 = vmatprep.subr.bf16.mxu0 0
  %1074 = vmatpush1.bf16.msra.mxu0 0
  %1075 = vmatprep.subr.bf16.mxu0 0
  %1076 = vmatpush1.bf16.msra.mxu0 0
  %1077 = vmatprep.subr.bf16.mxu0 0
  %1078 = vmatpush1.bf16.msra.mxu0 0
  %1079 = vmatprep.subr.bf16.mxu0 0
  %1080 = vmatpush1.bf16.msra.mxu0 0
  %1081 = vmatprep.subr.bf16.mxu0 0
  %1082 = vmatpush1.bf16.msra.mxu0 0
  %1083 = vmatprep.subr.bf16.mxu0 0
  %1084 = vmatpush1.bf16.msra.mxu0 0
  %1085 = vmatprep.mubr.bf16.mxu0 0
  %1086 = vmatmul.mubr.bf16.gmra.mrb[0].mxu0 %v473
  %v1087 = vpop.f32.mrb[0].mxu0
  %v1088 = vadd.f32 %v1000, %v1087
  %v1089 = vpop.f32.mrb[0].mxu0
  %v1090 = vpop.f32.mrb[0].mxu0
  %v1091 = vpop.f32.mrb[0].mxu0
  %1092 = vdwg.mxu0
  %1093 = vmatprep.subr.bf16.mxu0 0
  %1094 = vmatpush1.bf16.msra.mxu0 %v857
  %1095 = vmatprep.subr.bf16.mxu0 0
  %1096 = vmatpush1.bf16.msra.mxu0 %v858
  %1097 = vmatprep.subr.bf16.mxu0 0
  %1098 = vmatpush1.bf16.msra.mxu0 0
  %1099 = vmatprep.subr.bf16.mxu0 0
  %1100 = vmatpush1.bf16.msra.mxu0 0
  %1101 = vmatprep.subr.bf16.mxu0 0
  %1102 = vmatpush1.bf16.msra.mxu0 0
  %1103 = vmatprep.subr.bf16.mxu0 0
  %1104 = vmatpush1.bf16.msra.mxu0 0
  %1105 = vmatprep.subr.bf16.mxu0 0
  %1106 = vmatpush1.bf16.msra.mxu0 0
  %1107 = vmatprep.subr.bf16.mxu0 0
  %1108 = vmatpush1.bf16.msra.mxu0 0
  %1109 = vmatprep.subr.bf16.mxu0 0
  %1110 = vmatpush1.bf16.msra.mxu0 0
  %1111 = vmatprep.subr.bf16.mxu0 0
  %1112 = vmatpush1.bf16.msra.mxu0 0
  %1113 = vmatprep.subr.bf16.mxu0 0
  %1114 = vmatpush1.bf16.msra.mxu0 0
  %1115 = vmatprep.subr.bf16.mxu0 0
  %1116 = vmatpush1.bf16.msra.mxu0 0
  %1117 = vmatprep.subr.bf16.mxu0 0
  %1118 = vmatpush1.bf16.msra.mxu0 0
  %1119 = vmatprep.subr.bf16.mxu0 0
  %1120 = vmatpush1.bf16.msra.mxu0 0
  %1121 = vmatprep.subr.bf16.mxu0 0
  %1122 = vmatpush1.bf16.msra.mxu0 0
  %1123 = vmatprep.subr.bf16.mxu0 0
  %1124 = vmatpush1.bf16.msra.mxu0 0
  %1125 = vmatprep.mubr.bf16.mxu0 0
  %1126 = vmatmul.mubr.bf16.gmra.mrb[0].mxu0 %v62
  %v1127 = vpop.f32.mrb[0].mxu0
  %v1128 = vadd.f32 0.0, %v1127
  %v1129 = vpop.f32.mrb[0].mxu0
  %v1130 = vpop.f32.mrb[0].mxu0
  %v1131 = vadd.f32 0.0, %v1130
  %v1132 = vpop.f32.mrb[0].mxu0
  %1133 = vmatprep.mubr.bf16.mxu0 0
  %1134 = vmatmul.mubr.bf16.gmra.mrb[0].mxu0 %v65
  %v1135 = vpop.f32.mrb[0].mxu0
  %v1136 = vadd.f32 0.0, %v1135
  %v1137 = vpop.f32.mrb[0].mxu0
  %v1138 = vpop.f32.mrb[0].mxu0
  %v1139 = vadd.f32 0.0, %v1138
  %v1140 = vpop.f32.mrb[0].mxu0
  %1141 = vdwg.mxu0
  %v1142 = vadd.f32 %v853, %v1128
  %v1143 = vadd.f32 %v854, %v1131
  %v1144 = vadd.f32 %v855, %v1136
  %v1145 = vadd.f32 %v856, %v1139
  %v1146 = vpack.c.bf16 %v1143, %v1142
  %v1147 = vpack.c.bf16 %v1145, %v1144
  %s1148 = scalar_lea.vmem %s3, 128
  %v1149 = vld [vmem:[%s1148] sm:$0xf]
  %v1150 = vld [vmem:[%s1148 + $0x4] sm:$0xf]
  %v1151 = vld [vmem:[%s1148 + $0x8] sm:$0xf]
  %v1152 = vld [vmem:[%s1148 + $0xc] sm:$0xf]
  %v1153 = vld [vmem:[%s1148 + $0x10] sm:$0xf]
  %v1154 = vld [vmem:[%s1148 + $0x14] sm:$0xf]
  %v1155 = vld [vmem:[%s1148 + $0x18] sm:$0xf]
  %v1156 = vld [vmem:[%s1148 + $0x1c] sm:$0xf]
  %v1157 = vld [vmem:[%s1148 + $0x20] sm:$0xf]
  %v1158 = vld [vmem:[%s1148 + $0x24] sm:$0xf]
  %v1159 = vld [vmem:[%s1148 + $0x28] sm:$0xf]
  %v1160 = vld [vmem:[%s1148 + $0x2c] sm:$0xf]
  %v1161 = vld [vmem:[%s1148 + $0x30] sm:$0xf]
  %v1162 = vld [vmem:[%s1148 + $0x34] sm:$0xf]
  %v1163 = vld [vmem:[%s1148 + $0x38] sm:$0xf]
  %v1164 = vld [vmem:[%s1148 + $0x3c] sm:$0xf]
  %s1165 = scalar_lea.vmem %s4, 2
  %v1166 = vld [vmem:[%s1165] sm:$0x1]
  %v1168 = vlaneseq
  %v1169 = vshrl.u32 %v1168, 7
  %v1170 = vsub.s32 0, %v1169
  %v1171 = vrot.slane %v1166, %v1170
  %v1189 = vunpack.c.l.b16 %v1149
  %v1190 = vunpack.c.l.b16 %v1150
  %v1191 = vunpack.c.l.b16 %v1151
  %v1192 = vunpack.c.l.b16 %v1152
  %v1193 = vunpack.c.l.b16 %v1153
  %v1194 = vunpack.c.l.b16 %v1154
  %v1195 = vunpack.c.l.b16 %v1155
  %v1196 = vunpack.c.l.b16 %v1156
  %v1197 = vunpack.c.l.b16 %v1157
  %v1198 = vunpack.c.l.b16 %v1158
  %v1199 = vunpack.c.l.b16 %v1159
  %v1200 = vunpack.c.l.b16 %v1160
  %v1201 = vunpack.c.l.b16 %v1161
  %v1202 = vunpack.c.l.b16 %v1162
  %v1203 = vunpack.c.l.b16 %v1163
  %v1204 = vunpack.c.l.b16 %v1164
  %v1205 = vpack.c.b16 %v1190, %v1189
  %v1206 = vpack.c.b16 %v1192, %v1191
  %v1207 = vpack.c.b16 %v1194, %v1193
  %v1208 = vpack.c.b16 %v1196, %v1195
  %v1209 = vpack.c.b16 %v1198, %v1197
  %v1210 = vpack.c.b16 %v1200, %v1199
  %v1211 = vpack.c.b16 %v1202, %v1201
  %v1212 = vpack.c.b16 %v1204, %v1203
  %1221 = vmatprep.subr.bf16.mxu0 0
  %1222 = vmatpush1.bf16.msra.mxu0 %v1205
  %1223 = vmatprep.subr.bf16.mxu0 0
  %1224 = vmatpush1.bf16.msra.mxu0 %v1206
  %1225 = vmatprep.subr.bf16.mxu0 0
  %1226 = vmatpush1.bf16.msra.mxu0 %v1207
  %1227 = vmatprep.subr.bf16.mxu0 0
  %1228 = vmatpush1.bf16.msra.mxu0 %v1208
  %1229 = vmatprep.subr.bf16.mxu0 0
  %1230 = vmatpush1.bf16.msra.mxu0 %v1209
  %1231 = vmatprep.subr.bf16.mxu0 0
  %1232 = vmatpush1.bf16.msra.mxu0 %v1210
  %1233 = vmatprep.subr.bf16.mxu0 0
  %1234 = vmatpush1.bf16.msra.mxu0 %v1211
  %1235 = vmatprep.subr.bf16.mxu0 0
  %1236 = vmatpush1.bf16.msra.mxu0 %v1212
  %1237 = vmatprep.subr.bf16.mxu0 0
  %1238 = vmatpush1.bf16.msra.mxu0 0
  %1239 = vmatprep.subr.bf16.mxu0 0
  %1240 = vmatpush1.bf16.msra.mxu0 0
  %1241 = vmatprep.subr.bf16.mxu0 0
  %1242 = vmatpush1.bf16.msra.mxu0 0
  %1243 = vmatprep.subr.bf16.mxu0 0
  %1244 = vmatpush1.bf16.msra.mxu0 0
  %1245 = vmatprep.subr.bf16.mxu0 0
  %1246 = vmatpush1.bf16.msra.mxu0 0
  %1247 = vmatprep.subr.bf16.mxu0 0
  %1248 = vmatpush1.bf16.msra.mxu0 0
  %1249 = vmatprep.subr.bf16.mxu0 0
  %1250 = vmatpush1.bf16.msra.mxu0 0
  %1251 = vmatprep.subr.bf16.mxu0 0
  %1252 = vmatpush1.bf16.msra.mxu0 0
  %1253 = vmatprep.mubr.bf16.mxu0 0
  %1254 = vmatmul.mubr.bf16.gmra.mrb[0].mxu0 %v1146
  %v1255 = vpop.f32.mrb[0].mxu0
  %v1256 = vadd.f32 %v1171, %v1255
  %v1257 = vpop.f32.mrb[0].mxu0
  %v1258 = vpop.f32.mrb[0].mxu0
  %v1259 = vadd.f32 %v1171, %v1258
  %v1260 = vpop.f32.mrb[0].mxu0
  %1261 = vmatprep.mubr.bf16.mxu0 0
  %1262 = vmatmul.mubr.bf16.gmra.mrb[0].mxu0 %v1147
  %v1263 = vpop.f32.mrb[0].mxu0
  %v1264 = vadd.f32 %v1171, %v1263
  %v1265 = vpop.f32.mrb[0].mxu0
  %v1266 = vpop.f32.mrb[0].mxu0
  %v1267 = vadd.f32 %v1171, %v1266
  %v1268 = vpop.f32.mrb[0].mxu0
  %1269 = vdwg.mxu0
  %v1270 = vadd.f32 %v1256, %v1259
  %v1271 = vadd.f32 %v1270, %v1264
  %v1272 = vadd.f32 %v1271, %v1267
  %v1273 = vrot.slane %v1272, 4
  %v1274 = vadd.f32 %v1272, %v1273
  %v1275 = vrot.slane %v1274, 2
  %v1276 = vadd.f32 %v1274, %v1275
  %v1277 = vrot.slane %v1276, 1
  %v1278 = vadd.f32 %v1276, %v1277
  %v1279 = vmul.f32 %v1278, 0.03125
  %v1280 = vsub.f32 %v1256, %v1279
  %v1281 = vsub.f32 %v1259, %v1279
  %v1282 = vsub.f32 %v1264, %v1279
  %v1283 = vsub.f32 %v1267, %v1279
  %v1284 = vmul.f32 %v1280, %v1280
  %v1285 = vmul.f32 %v1281, %v1281
  %v1286 = vmul.f32 %v1282, %v1282
  %v1287 = vmul.f32 %v1283, %v1283
  %v1288 = vadd.f32 %v1284, %v1285
  %v1289 = vadd.f32 %v1288, %v1286
  %v1290 = vadd.f32 %v1289, %v1287
  %v1291 = vrot.slane %v1290, 4
  %v1292 = vadd.f32 %v1290, %v1291
  %v1293 = vrot.slane %v1292, 2
  %v1294 = vadd.f32 %v1292, %v1293
  %v1295 = vrot.slane %v1294, 1
  %v1296 = vadd.f32 %v1294, %v1295
  %v1297 = vmul.f32 %v1296, 0.03125
  %v1298 = vadd.f32 %v1297, 1e-05
  %v1299 = vrsqrt.pop %v1298
  %v1300 = vmul.f32 %v1280, %v1299
  %v1301 = vmul.f32 %v1281, %v1299
  %v1302 = vmul.f32 %v1282, %v1299
  %v1303 = vmul.f32 %v1283, %v1299
  %s1304 = scalar_lea.vmem %s5, 2
  %v1305 = vld [vmem:[%s1304] sm:$0x1]
  %v1307 = vlaneseq
  %v1308 = vshrl.u32 %v1307, 7
  %v1309 = vsub.s32 0, %v1308
  %v1310 = vrot.slane %v1305, %v1309
  %v1312 = vmul.f32 %v1300, %v1310
  %v1313 = vmul.f32 %v1301, %v1310
  %v1314 = vmul.f32 %v1302, %v1310
  %v1315 = vmul.f32 %v1303, %v1310
  %s1316 = scalar_lea.vmem %s6, 2
  %v1317 = vld [vmem:[%s1316] sm:$0x1]
  %v1319 = vlaneseq
  %v1320 = vshrl.u32 %v1319, 7
  %v1321 = vsub.s32 0, %v1320
  %v1322 = vrot.slane %v1317, %v1321
  %v1324 = vadd.f32 %v1312, %v1322
  %v1325 = vadd.f32 %v1313, %v1322
  %v1326 = vadd.f32 %v1314, %v1322
  %v1327 = vadd.f32 %v1315, %v1322
  %v1328 = vmax.f32 %v1324, 0.0
  %v1329 = vmax.f32 %v1325, 0.0
  %v1330 = vmax.f32 %v1326, 0.0
  %v1331 = vmax.f32 %v1327, 0.0
  %v1332 = vpack.c.bf16 %v1329, %v1328
  %v1333 = vpack.c.bf16 %v1331, %v1330
  %s1334 = scalar_lea.vmem %s7, 128
  %v1335 = vld [vmem:[%s1334] sm:$0xf]
  %v1336 = vld [vmem:[%s1334 + $0x4] sm:$0xf]
  %v1337 = vld [vmem:[%s1334 + $0x8] sm:$0xf]
  %v1338 = vld [vmem:[%s1334 + $0xc] sm:$0xf]
  %v1339 = vld [vmem:[%s1334 + $0x10] sm:$0xf]
  %v1340 = vld [vmem:[%s1334 + $0x14] sm:$0xf]
  %v1341 = vld [vmem:[%s1334 + $0x18] sm:$0xf]
  %v1342 = vld [vmem:[%s1334 + $0x1c] sm:$0xf]
  %v1343 = vld [vmem:[%s1334 + $0x20] sm:$0xf]
  %v1344 = vld [vmem:[%s1334 + $0x24] sm:$0xf]
  %v1345 = vld [vmem:[%s1334 + $0x28] sm:$0xf]
  %v1346 = vld [vmem:[%s1334 + $0x2c] sm:$0xf]
  %v1347 = vld [vmem:[%s1334 + $0x30] sm:$0xf]
  %v1348 = vld [vmem:[%s1334 + $0x34] sm:$0xf]
  %v1349 = vld [vmem:[%s1334 + $0x38] sm:$0xf]
  %v1350 = vld [vmem:[%s1334 + $0x3c] sm:$0xf]
  %s1351 = scalar_lea.vmem %s8, 2
  %v1352 = vld [vmem:[%s1351] sm:$0x1]
  %v1354 = vlaneseq
  %v1355 = vshrl.u32 %v1354, 7
  %v1356 = vsub.s32 0, %v1355
  %v1357 = vrot.slane %v1352, %v1356
  %v1375 = vunpack.c.l.b16 %v1335
  %v1376 = vunpack.c.l.b16 %v1336
  %v1377 = vunpack.c.l.b16 %v1337
  %v1378 = vunpack.c.l.b16 %v1338
  %v1379 = vunpack.c.l.b16 %v1339
  %v1380 = vunpack.c.l.b16 %v1340
  %v1381 = vunpack.c.l.b16 %v1341
  %v1382 = vunpack.c.l.b16 %v1342
  %v1383 = vunpack.c.l.b16 %v1343
  %v1384 = vunpack.c.l.b16 %v1344
  %v1385 = vunpack.c.l.b16 %v1345
  %v1386 = vunpack.c.l.b16 %v1346
  %v1387 = vunpack.c.l.b16 %v1347
  %v1388 = vunpack.c.l.b16 %v1348
  %v1389 = vunpack.c.l.b16 %v1349
  %v1390 = vunpack.c.l.b16 %v1350
  %v1391 = vpack.c.b16 %v1376, %v1375
  %v1392 = vpack.c.b16 %v1378, %v1377
  %v1393 = vpack.c.b16 %v1380, %v1379
  %v1394 = vpack.c.b16 %v1382, %v1381
  %v1395 = vpack.c.b16 %v1384, %v1383
  %v1396 = vpack.c.b16 %v1386, %v1385
  %v1397 = vpack.c.b16 %v1388, %v1387
  %v1398 = vpack.c.b16 %v1390, %v1389
  %1407 = vmatprep.subr.bf16.mxu0 0
  %1408 = vmatpush1.bf16.msra.mxu0 %v1391
  %1409 = vmatprep.subr.bf16.mxu0 0
  %1410 = vmatpush1.bf16.msra.mxu0 %v1392
  %1411 = vmatprep.subr.bf16.mxu0 0
  %1412 = vmatpush1.bf16.msra.mxu0 %v1393
  %1413 = vmatprep.subr.bf16.mxu0 0
  %1414 = vmatpush1.bf16.msra.mxu0 %v1394
  %1415 = vmatprep.subr.bf16.mxu0 0
  %1416 = vmatpush1.bf16.msra.mxu0 %v1395
  %1417 = vmatprep.subr.bf16.mxu0 0
  %1418 = vmatpush1.bf16.msra.mxu0 %v1396
  %1419 = vmatprep.subr.bf16.mxu0 0
  %1420 = vmatpush1.bf16.msra.mxu0 %v1397
  %1421 = vmatprep.subr.bf16.mxu0 0
  %1422 = vmatpush1.bf16.msra.mxu0 %v1398
  %1423 = vmatprep.subr.bf16.mxu0 0
  %1424 = vmatpush1.bf16.msra.mxu0 0
  %1425 = vmatprep.subr.bf16.mxu0 0
  %1426 = vmatpush1.bf16.msra.mxu0 0
  %1427 = vmatprep.subr.bf16.mxu0 0
  %1428 = vmatpush1.bf16.msra.mxu0 0
  %1429 = vmatprep.subr.bf16.mxu0 0
  %1430 = vmatpush1.bf16.msra.mxu0 0
  %1431 = vmatprep.subr.bf16.mxu0 0
  %1432 = vmatpush1.bf16.msra.mxu0 0
  %1433 = vmatprep.subr.bf16.mxu0 0
  %1434 = vmatpush1.bf16.msra.mxu0 0
  %1435 = vmatprep.subr.bf16.mxu0 0
  %1436 = vmatpush1.bf16.msra.mxu0 0
  %1437 = vmatprep.subr.bf16.mxu0 0
  %1438 = vmatpush1.bf16.msra.mxu0 0
  %1439 = vmatprep.mubr.bf16.mxu0 0
  %1440 = vmatmul.mubr.bf16.gmra.mrb[0].mxu0 %v1332
  %v1441 = vpop.f32.mrb[0].mxu0
  %v1442 = vadd.f32 %v1357, %v1441
  %v1443 = vpop.f32.mrb[0].mxu0
  %v1444 = vpop.f32.mrb[0].mxu0
  %v1445 = vadd.f32 %v1357, %v1444
  %v1446 = vpop.f32.mrb[0].mxu0
  %1447 = vmatprep.mubr.bf16.mxu0 0
  %1448 = vmatmul.mubr.bf16.gmra.mrb[0].mxu0 %v1333
  %v1449 = vpop.f32.mrb[0].mxu0
  %v1450 = vadd.f32 %v1357, %v1449
  %v1451 = vpop.f32.mrb[0].mxu0
  %v1452 = vpop.f32.mrb[0].mxu0
  %v1453 = vadd.f32 %v1357, %v1452
  %v1454 = vpop.f32.mrb[0].mxu0
  %1455 = vdwg.mxu0
  %v1456 = vmax.f32 %v1442, 0.0
  %v1457 = vmax.f32 %v1445, 0.0
  %v1458 = vmax.f32 %v1450, 0.0
  %v1459 = vmax.f32 %v1453, 0.0
  %v1460 = vpack.c.bf16 %v1457, %v1456
  %v1461 = vpack.c.bf16 %v1459, %v1458
  %1462 = vmatprep.subr.bf16.mxu0 0
  %1463 = vmatpush1.bf16.msra.mxu0 %v1460
  %1464 = vmatprep.subr.bf16.mxu0 0
  %1465 = vmatpush1.bf16.msra.mxu0 %v1461
  %1466 = vmatprep.subr.bf16.mxu0 0
  %1467 = vmatpush1.bf16.msra.mxu0 0
  %1468 = vmatprep.subr.bf16.mxu0 0
  %1469 = vmatpush1.bf16.msra.mxu0 0
  %1470 = vmatprep.subr.bf16.mxu0 0
  %1471 = vmatpush1.bf16.msra.mxu0 0
  %1472 = vmatprep.subr.bf16.mxu0 0
  %1473 = vmatpush1.bf16.msra.mxu0 0
  %1474 = vmatprep.subr.bf16.mxu0 0
  %1475 = vmatpush1.bf16.msra.mxu0 0
  %1476 = vmatprep.subr.bf16.mxu0 0
  %1477 = vmatpush1.bf16.msra.mxu0 0
  %1478 = vmatprep.subr.bf16.mxu0 0
  %1479 = vmatpush1.bf16.msra.mxu0 0
  %1480 = vmatprep.subr.bf16.mxu0 0
  %1481 = vmatpush1.bf16.msra.mxu0 0
  %1482 = vmatprep.subr.bf16.mxu0 0
  %1483 = vmatpush1.bf16.msra.mxu0 0
  %1484 = vmatprep.subr.bf16.mxu0 0
  %1485 = vmatpush1.bf16.msra.mxu0 0
  %1486 = vmatprep.subr.bf16.mxu0 0
  %1487 = vmatpush1.bf16.msra.mxu0 0
  %1488 = vmatprep.subr.bf16.mxu0 0
  %1489 = vmatpush1.bf16.msra.mxu0 0
  %1490 = vmatprep.subr.bf16.mxu0 0
  %1491 = vmatpush1.bf16.msra.mxu0 0
  %1492 = vmatprep.subr.bf16.mxu0 0
  %1493 = vmatpush1.bf16.msra.mxu0 0
  %1494 = vmatprep.mubr.bf16.mxu0 0
  %1495 = vmatmul.mubr.bf16.gmra.mrb[0].mxu0 %v431
  %v1496 = vpop.f32.mrb[0].mxu0
  %v1497 = vadd.f32 0.0, %v1496
  %v1498 = vpop.f32.mrb[0].mxu0
  %v1499 = vpop.f32.mrb[0].mxu0
  %v1500 = vpop.f32.mrb[0].mxu0
  %1501 = vdwg.mxu0
  %v1502 = vpack.c.bf16 %v1497, %v1497
  %s1503 = scalar_lea.vmem %s9, 128
  %v1504 = vld [vmem:[%s1503] sm:$0xf]
  %v1505 = vld [vmem:[%s1503 + $0x4] sm:$0xf]
  %v1506 = vld [vmem:[%s1503 + $0x8] sm:$0xf]
  %v1507 = vld [vmem:[%s1503 + $0xc] sm:$0xf]
  %v1508 = vld [vmem:[%s1503 + $0x10] sm:$0xf]
  %v1509 = vld [vmem:[%s1503 + $0x14] sm:$0xf]
  %v1510 = vld [vmem:[%s1503 + $0x18] sm:$0xf]
  %v1511 = vld [vmem:[%s1503 + $0x1c] sm:$0xf]
  %v1512 = vld [vmem:[%s1503 + $0x20] sm:$0xf]
  %v1513 = vld [vmem:[%s1503 + $0x24] sm:$0xf]
  %v1514 = vld [vmem:[%s1503 + $0x28] sm:$0xf]
  %v1515 = vld [vmem:[%s1503 + $0x2c] sm:$0xf]
  %v1516 = vld [vmem:[%s1503 + $0x30] sm:$0xf]
  %v1517 = vld [vmem:[%s1503 + $0x34] sm:$0xf]
  %v1518 = vld [vmem:[%s1503 + $0x38] sm:$0xf]
  %v1519 = vld [vmem:[%s1503 + $0x3c] sm:$0xf]
  %v1536 = vunpack.c.l.b16 %v1504
  %v1537 = vunpack.c.l.b16 %v1505
  %v1538 = vunpack.c.l.b16 %v1506
  %v1539 = vunpack.c.l.b16 %v1507
  %v1540 = vunpack.c.l.b16 %v1508
  %v1541 = vunpack.c.l.b16 %v1509
  %v1542 = vunpack.c.l.b16 %v1510
  %v1543 = vunpack.c.l.b16 %v1511
  %v1544 = vunpack.c.l.b16 %v1512
  %v1545 = vunpack.c.l.b16 %v1513
  %v1546 = vunpack.c.l.b16 %v1514
  %v1547 = vunpack.c.l.b16 %v1515
  %v1548 = vunpack.c.l.b16 %v1516
  %v1549 = vunpack.c.l.b16 %v1517
  %v1550 = vunpack.c.l.b16 %v1518
  %v1551 = vunpack.c.l.b16 %v1519
  %v1552 = vpack.c.b16 %v1537, %v1536
  %v1553 = vpack.c.b16 %v1539, %v1538
  %v1554 = vpack.c.b16 %v1541, %v1540
  %v1555 = vpack.c.b16 %v1543, %v1542
  %v1556 = vpack.c.b16 %v1545, %v1544
  %v1557 = vpack.c.b16 %v1547, %v1546
  %v1558 = vpack.c.b16 %v1549, %v1548
  %v1559 = vpack.c.b16 %v1551, %v1550
  %1568 = vmatprep.subr.bf16.mxu0 0
  %1569 = vmatpush1.bf16.msra.mxu0 %v1552
  %1570 = vmatprep.subr.bf16.mxu0 0
  %1571 = vmatpush1.bf16.msra.mxu0 %v1553
  %1572 = vmatprep.subr.bf16.mxu0 0
  %1573 = vmatpush1.bf16.msra.mxu0 %v1554
  %1574 = vmatprep.subr.bf16.mxu0 0
  %1575 = vmatpush1.bf16.msra.mxu0 %v1555
  %1576 = vmatprep.subr.bf16.mxu0 0
  %1577 = vmatpush1.bf16.msra.mxu0 %v1556
  %1578 = vmatprep.subr.bf16.mxu0 0
  %1579 = vmatpush1.bf16.msra.mxu0 %v1557
  %1580 = vmatprep.subr.bf16.mxu0 0
  %1581 = vmatpush1.bf16.msra.mxu0 %v1558
  %1582 = vmatprep.subr.bf16.mxu0 0
  %1583 = vmatpush1.bf16.msra.mxu0 %v1559
  %1584 = vmatprep.subr.bf16.mxu0 0
  %1585 = vmatpush1.bf16.msra.mxu0 0
  %1586 = vmatprep.subr.bf16.mxu0 0
  %1587 = vmatpush1.bf16.msra.mxu0 0
  %1588 = vmatprep.subr.bf16.mxu0 0
  %1589 = vmatpush1.bf16.msra.mxu0 0
  %1590 = vmatprep.subr.bf16.mxu0 0
  %1591 = vmatpush1.bf16.msra.mxu0 0
  %1592 = vmatprep.subr.bf16.mxu0 0
  %1593 = vmatpush1.bf16.msra.mxu0 0
  %1594 = vmatprep.subr.bf16.mxu0 0
  %1595 = vmatpush1.bf16.msra.mxu0 0
  %1596 = vmatprep.subr.bf16.mxu0 0
  %1597 = vmatpush1.bf16.msra.mxu0 0
  %1598 = vmatprep.subr.bf16.mxu0 0
  %1599 = vmatpush1.bf16.msra.mxu0 0
  %1600 = vmatprep.mubr.bf16.mxu0 0
  %1601 = vmatmul.mubr.bf16.gmra.mrb[0].mxu0 %v1502
  %v1602 = vpop.f32.mrb[0].mxu0
  %v1603 = vadd.f32 0.0, %v1602
  %v1604 = vpop.f32.mrb[0].mxu0
  %v1605 = vpop.f32.mrb[0].mxu0
  %v1606 = vpop.f32.mrb[0].mxu0
  %1607 = vdwg.mxu0
  %v1608 = vadd.f32 %v1088, %v1603
  %v1609 = vld [vmem:[%s10] sm:$0x1]
  %v1611 = vlaneseq
  %v1612 = vshrl.u32 %v1611, 7
  %v1613 = vsub.s32 0, %v1612
  %v1614 = vrot.slane %v1609, %v1613
  %v1616 = vadd.f32 %v1608, %v1614
  %v1617 = vsub.f32 0.0, %v1616
  %v1618 = vmul.f32 %v1617, 1.442695
  %v1619 = vpow.pop %v1618
  %v1620 = vadd.f32 %v1619, 1.0
  %v1621 = vrcp.pop %v1620
  %1622 = vst [vmem:[%s11] sm:$0xff] %v1621
  // Predicated region
  $region46: #{gin_forward.1} parent=0 // pred_check
    _
  $region47: #{gin_forward.1} parent=0 // pred_check_branch
    %1624 = sbr.rel (0) target = $region49
  $region48: #{gin_forward.1} parent=0 // pred_region
    _
  $region49: #{gin_forward.1} parent=0 // pred_fallthru
    _
  // Predicated region
  $region50: #{gin_forward.1} parent=0 // pred_check
    _
  $region51: #{gin_forward.1} parent=0 // pred_check_branch
    %1626 = sbr.rel (0) target = $region53
  $region52: #{gin_forward.1} parent=0 // pred_region
    _
  $region53: #{gin_forward.1} parent=0 // pred_fallthru
    _

</llo_original>
